<compile_context>
chip_gen: v6e
topology: v6e:2x2x1
jax: 0.10.0
libtpu: 0.0.40
codegen_flags: <defaults>
</compile_context>

<pallas_src>
import functools

import jax
import jax.numpy as jnp
from jax.experimental import pallas as pl
from jax.experimental.pallas import tpu as pltpu


def _unpool_scatter_kernel(idx_ref, h_hbm, init_hbm, out_hbm, sem,
                           *, rows_per_step, total_rows):
    # idx_ref : (k,) int32 in SMEM (scalar prefetch)
    # h_hbm   : (k, D) source rows, left in HBM (pl.ANY)
    # init_hbm: (N, D) zero-filled buffer aliased to the output; it only
    #           supplies zeros for untouched rows -- never touched here.
    # out_hbm : (N, D) output, left in HBM (pl.ANY)
    # sem     : (rows_per_step,) DMA semaphores
    del init_hbm
    base = pl.program_id(0) * rows_per_step
    needs_guard = (total_rows % rows_per_step) != 0

    def row_copy(r, row):
        # One row: HBM -> HBM, no VMEM staging, no vreg traffic.
        return pltpu.make_async_copy(
            h_hbm.at[row], out_hbm.at[idx_ref[row]], sem.at[r])

    # Statically unrolled issue loop: all R DMAs started (kept in flight) ...
    for r in range(rows_per_step):
        row = base + r

        def _start(r=r, row=row):
            row_copy(r, row).start()

        if needs_guard:
            pl.when(row < total_rows)(_start)
        else:
            _start()

    # ... then wait them all (matched guards keep starts/waits paired).
    for r in range(rows_per_step):
        row = base + r

        def _wait(r=r, row=row):
            row_copy(r, row).wait()

        if needs_guard:
            pl.when(row < total_rows)(_wait)
        else:
            _wait()


def unpool(g, h, pre_h, idx, *, rows_per_step=32):
    """Pallas equivalent of Unpool.forward(g, h, pre_h, idx) -> (g, new_h)."""
    del pre_h  # unused by the reference module
    N = g.shape[0]
    k, D = h.shape
    idx32 = idx.astype(jnp.int32).reshape(k)

    R = max(1, min(k, rows_per_step))
    num_steps = (k + R - 1) // R

    # Zero-filled destination, aliased with the kernel output: rows not
    # referenced by idx stay zero with no kernel-side work.
    zeros_init = jnp.zeros((N, D), dtype=h.dtype)

    kernel = functools.partial(
        _unpool_scatter_kernel, rows_per_step=R, total_rows=k)

    new_h = pl.pallas_call(
        kernel,
        out_shape=jax.ShapeDtypeStruct((N, D), h.dtype),
        grid_spec=pltpu.PrefetchScalarGridSpec(
            num_scalar_prefetch=1,
            grid=(num_steps,),
            in_specs=[
                pl.BlockSpec(memory_space=pl.ANY),  # h: raw HBM, manual DMA
                pl.BlockSpec(memory_space=pl.ANY),  # zero init (aliased)
            ],
            out_specs=pl.BlockSpec(memory_space=pl.ANY),
            scratch_shapes=[pltpu.SemaphoreType.DMA((R,))],
        ),
        # Call operands are (idx, h, zeros_init) -> alias operand 2 to output 0
        # (operand numbering includes the scalar-prefetch operand).
        input_output_aliases={2: 0},
        compiler_params=pltpu.CompilerParams(
            dimension_semantics=("arbitrary",),
        ),
    )(idx32, h, zeros_init)

    # g passes through untouched, exactly as in the PyTorch module.
    return g, new_h


if __name__ == "__main__":
    key = jax.random.PRNGKey(0)
    kg, kh, kp, ki = jax.random.split(key, 4)

    # graph nodes, pooled nodes, feature width (lane-dense D = 128)
    N, k, D = 64, 16, 128
    g = jax.random.normal(kg, (N, N), dtype=jnp.float32)        # adjacency
    h = jax.random.normal(kh, (k, D), dtype=jnp.float32)        # pooled feats
    pre_h = jax.random.normal(kp, (N, D), dtype=jnp.float32)    # unused
    idx = jax.random.permutation(ki, N)[:k].astype(jnp.int32)   # unique rows

    g_out, new_h = jax.jit(unpool)(g, h, pre_h, idx)
    jax.block_until_ready((g_out, new_h))

    # Reference check (plain JAX scatter).
    ref = jnp.zeros((N, D), dtype=h.dtype).at[idx].set(h)
    assert jnp.allclose(g_out, g)
    assert jnp.allclose(new_h, ref)

    print("KERNEL_OK")
</pallas_src>

<mosaic_0001>
module attributes {stable_mosaic.version = 11 : i64} {
  func.func @_unpool_scatter_kernel(%arg0: i32, %arg1: memref<16xi32, #tpu.memory_space<smem>>, %arg2: memref<16x128xf32, #tpu.memory_space<any>>, %arg3: memref<64x128xf32, #tpu.memory_space<any>>, %arg4: memref<64x128xf32, #tpu.memory_space<any>>, %arg5: memref<16x!tpu.dma_semaphore, #tpu.memory_space<semaphore_mem>>) attributes {dimension_semantics = [#tpu.dimension_semantics<arbitrary>], iteration_bounds = array<i64: 1>, scalar_prefetch = 1 : i64, scratch_operands = 1 : i64, tpu.core_type = #tpu.core_type<tc>, window_params = [{}, {}, {}]} {
    %c16_i32 = arith.constant 16 : i32
    %0 = arith.muli %arg0, %c16_i32 : i32
    %c0_i32 = arith.constant 0 : i32
    %1 = arith.addi %0, %c0_i32 : i32
    %2 = arith.index_cast %1 : i32 to index
    %3 = memref.load %arg1[%2] : memref<16xi32, #tpu.memory_space<smem>>
    %c0_i32_0 = arith.constant 0 : i32
    %c0_i32_1 = arith.constant 0 : i32
    %4 = tpu.memref_slice %arg2[%1, %c0_i32_1] : memref<16x128xf32, #tpu.memory_space<any>> -> memref<1x128xf32, #tpu.memory_space<any>>
    %5 = tpu.memref_squeeze %4 : memref<1x128xf32, #tpu.memory_space<any>> -> memref<128xf32, #tpu.memory_space<any>>
    %c0_i32_2 = arith.constant 0 : i32
    %6 = tpu.memref_slice %arg4[%3, %c0_i32_2] : memref<64x128xf32, #tpu.memory_space<any>> -> memref<1x128xf32, #tpu.memory_space<any>>
    %7 = tpu.memref_squeeze %6 : memref<1x128xf32, #tpu.memory_space<any>> -> memref<128xf32, #tpu.memory_space<any>>
    %8 = tpu.memref_slice %arg5[%c0_i32_0] : memref<16x!tpu.dma_semaphore, #tpu.memory_space<semaphore_mem>> -> memref<1x!tpu.dma_semaphore, #tpu.memory_space<semaphore_mem>>
    %9 = tpu.memref_squeeze %8 : memref<1x!tpu.dma_semaphore, #tpu.memory_space<semaphore_mem>> -> memref<!tpu.dma_semaphore, #tpu.memory_space<semaphore_mem>>
    tpu.enqueue_dma source(%5 : memref<128xf32, #tpu.memory_space<any>>) target(%7 : memref<128xf32, #tpu.memory_space<any>>) target_semaphore(%9 : memref<!tpu.dma_semaphore, #tpu.memory_space<semaphore_mem>>)
    %c1_i32 = arith.constant 1 : i32
    %10 = arith.addi %0, %c1_i32 : i32
    %11 = arith.index_cast %10 : i32 to index
    %12 = memref.load %arg1[%11] : memref<16xi32, #tpu.memory_space<smem>>
    %c1_i32_3 = arith.constant 1 : i32
    %c0_i32_4 = arith.constant 0 : i32
    %13 = tpu.memref_slice %arg2[%10, %c0_i32_4] : memref<16x128xf32, #tpu.memory_space<any>> -> memref<1x128xf32, #tpu.memory_space<any>>
    %14 = tpu.memref_squeeze %13 : memref<1x128xf32, #tpu.memory_space<any>> -> memref<128xf32, #tpu.memory_space<any>>
    %c0_i32_5 = arith.constant 0 : i32
    %15 = tpu.memref_slice %arg4[%12, %c0_i32_5] : memref<64x128xf32, #tpu.memory_space<any>> -> memref<1x128xf32, #tpu.memory_space<any>>
    %16 = tpu.memref_squeeze %15 : memref<1x128xf32, #tpu.memory_space<any>> -> memref<128xf32, #tpu.memory_space<any>>
    %17 = tpu.memref_slice %arg5[%c1_i32_3] : memref<16x!tpu.dma_semaphore, #tpu.memory_space<semaphore_mem>> -> memref<1x!tpu.dma_semaphore, #tpu.memory_space<semaphore_mem>>
    %18 = tpu.memref_squeeze %17 : memref<1x!tpu.dma_semaphore, #tpu.memory_space<semaphore_mem>> -> memref<!tpu.dma_semaphore, #tpu.memory_space<semaphore_mem>>
    tpu.enqueue_dma source(%14 : memref<128xf32, #tpu.memory_space<any>>) target(%16 : memref<128xf32, #tpu.memory_space<any>>) target_semaphore(%18 : memref<!tpu.dma_semaphore, #tpu.memory_space<semaphore_mem>>)
    %c2_i32 = arith.constant 2 : i32
    %19 = arith.addi %0, %c2_i32 : i32
    %20 = arith.index_cast %19 : i32 to index
    %21 = memref.load %arg1[%20] : memref<16xi32, #tpu.memory_space<smem>>
    %c2_i32_6 = arith.constant 2 : i32
    %c0_i32_7 = arith.constant 0 : i32
    %22 = tpu.memref_slice %arg2[%19, %c0_i32_7] : memref<16x128xf32, #tpu.memory_space<any>> -> memref<1x128xf32, #tpu.memory_space<any>>
    %23 = tpu.memref_squeeze %22 : memref<1x128xf32, #tpu.memory_space<any>> -> memref<128xf32, #tpu.memory_space<any>>
    %c0_i32_8 = arith.constant 0 : i32
    %24 = tpu.memref_slice %arg4[%21, %c0_i32_8] : memref<64x128xf32, #tpu.memory_space<any>> -> memref<1x128xf32, #tpu.memory_space<any>>
    %25 = tpu.memref_squeeze %24 : memref<1x128xf32, #tpu.memory_space<any>> -> memref<128xf32, #tpu.memory_space<any>>
    %26 = tpu.memref_slice %arg5[%c2_i32_6] : memref<16x!tpu.dma_semaphore, #tpu.memory_space<semaphore_mem>> -> memref<1x!tpu.dma_semaphore, #tpu.memory_space<semaphore_mem>>
    %27 = tpu.memref_squeeze %26 : memref<1x!tpu.dma_semaphore, #tpu.memory_space<semaphore_mem>> -> memref<!tpu.dma_semaphore, #tpu.memory_space<semaphore_mem>>
    tpu.enqueue_dma source(%23 : memref<128xf32, #tpu.memory_space<any>>) target(%25 : memref<128xf32, #tpu.memory_space<any>>) target_semaphore(%27 : memref<!tpu.dma_semaphore, #tpu.memory_space<semaphore_mem>>)
    %c3_i32 = arith.constant 3 : i32
    %28 = arith.addi %0, %c3_i32 : i32
    %29 = arith.index_cast %28 : i32 to index
    %30 = memref.load %arg1[%29] : memref<16xi32, #tpu.memory_space<smem>>
    %c3_i32_9 = arith.constant 3 : i32
    %c0_i32_10 = arith.constant 0 : i32
    %31 = tpu.memref_slice %arg2[%28, %c0_i32_10] : memref<16x128xf32, #tpu.memory_space<any>> -> memref<1x128xf32, #tpu.memory_space<any>>
    %32 = tpu.memref_squeeze %31 : memref<1x128xf32, #tpu.memory_space<any>> -> memref<128xf32, #tpu.memory_space<any>>
    %c0_i32_11 = arith.constant 0 : i32
    %33 = tpu.memref_slice %arg4[%30, %c0_i32_11] : memref<64x128xf32, #tpu.memory_space<any>> -> memref<1x128xf32, #tpu.memory_space<any>>
    %34 = tpu.memref_squeeze %33 : memref<1x128xf32, #tpu.memory_space<any>> -> memref<128xf32, #tpu.memory_space<any>>
    %35 = tpu.memref_slice %arg5[%c3_i32_9] : memref<16x!tpu.dma_semaphore, #tpu.memory_space<semaphore_mem>> -> memref<1x!tpu.dma_semaphore, #tpu.memory_space<semaphore_mem>>
    %36 = tpu.memref_squeeze %35 : memref<1x!tpu.dma_semaphore, #tpu.memory_space<semaphore_mem>> -> memref<!tpu.dma_semaphore, #tpu.memory_space<semaphore_mem>>
    tpu.enqueue_dma source(%32 : memref<128xf32, #tpu.memory_space<any>>) target(%34 : memref<128xf32, #tpu.memory_space<any>>) target_semaphore(%36 : memref<!tpu.dma_semaphore, #tpu.memory_space<semaphore_mem>>)
    %c4_i32 = arith.constant 4 : i32
    %37 = arith.addi %0, %c4_i32 : i32
    %38 = arith.index_cast %37 : i32 to index
    %39 = memref.load %arg1[%38] : memref<16xi32, #tpu.memory_space<smem>>
    %c4_i32_12 = arith.constant 4 : i32
    %c0_i32_13 = arith.constant 0 : i32
    %40 = tpu.memref_slice %arg2[%37, %c0_i32_13] : memref<16x128xf32, #tpu.memory_space<any>> -> memref<1x128xf32, #tpu.memory_space<any>>
    %41 = tpu.memref_squeeze %40 : memref<1x128xf32, #tpu.memory_space<any>> -> memref<128xf32, #tpu.memory_space<any>>
    %c0_i32_14 = arith.constant 0 : i32
    %42 = tpu.memref_slice %arg4[%39, %c0_i32_14] : memref<64x128xf32, #tpu.memory_space<any>> -> memref<1x128xf32, #tpu.memory_space<any>>
    %43 = tpu.memref_squeeze %42 : memref<1x128xf32, #tpu.memory_space<any>> -> memref<128xf32, #tpu.memory_space<any>>
    %44 = tpu.memref_slice %arg5[%c4_i32_12] : memref<16x!tpu.dma_semaphore, #tpu.memory_space<semaphore_mem>> -> memref<1x!tpu.dma_semaphore, #tpu.memory_space<semaphore_mem>>
    %45 = tpu.memref_squeeze %44 : memref<1x!tpu.dma_semaphore, #tpu.memory_space<semaphore_mem>> -> memref<!tpu.dma_semaphore, #tpu.memory_space<semaphore_mem>>
    tpu.enqueue_dma source(%41 : memref<128xf32, #tpu.memory_space<any>>) target(%43 : memref<128xf32, #tpu.memory_space<any>>) target_semaphore(%45 : memref<!tpu.dma_semaphore, #tpu.memory_space<semaphore_mem>>)
    %c5_i32 = arith.constant 5 : i32
    %46 = arith.addi %0, %c5_i32 : i32
    %47 = arith.index_cast %46 : i32 to index
    %48 = memref.load %arg1[%47] : memref<16xi32, #tpu.memory_space<smem>>
    %c5_i32_15 = arith.constant 5 : i32
    %c0_i32_16 = arith.constant 0 : i32
    %49 = tpu.memref_slice %arg2[%46, %c0_i32_16] : memref<16x128xf32, #tpu.memory_space<any>> -> memref<1x128xf32, #tpu.memory_space<any>>
    %50 = tpu.memref_squeeze %49 : memref<1x128xf32, #tpu.memory_space<any>> -> memref<128xf32, #tpu.memory_space<any>>
    %c0_i32_17 = arith.constant 0 : i32
    %51 = tpu.memref_slice %arg4[%48, %c0_i32_17] : memref<64x128xf32, #tpu.memory_space<any>> -> memref<1x128xf32, #tpu.memory_space<any>>
    %52 = tpu.memref_squeeze %51 : memref<1x128xf32, #tpu.memory_space<any>> -> memref<128xf32, #tpu.memory_space<any>>
    %53 = tpu.memref_slice %arg5[%c5_i32_15] : memref<16x!tpu.dma_semaphore, #tpu.memory_space<semaphore_mem>> -> memref<1x!tpu.dma_semaphore, #tpu.memory_space<semaphore_mem>>
    %54 = tpu.memref_squeeze %53 : memref<1x!tpu.dma_semaphore, #tpu.memory_space<semaphore_mem>> -> memref<!tpu.dma_semaphore, #tpu.memory_space<semaphore_mem>>
    tpu.enqueue_dma source(%50 : memref<128xf32, #tpu.memory_space<any>>) target(%52 : memref<128xf32, #tpu.memory_space<any>>) target_semaphore(%54 : memref<!tpu.dma_semaphore, #tpu.memory_space<semaphore_mem>>)
    %c6_i32 = arith.constant 6 : i32
    %55 = arith.addi %0, %c6_i32 : i32
    %56 = arith.index_cast %55 : i32 to index
    %57 = memref.load %arg1[%56] : memref<16xi32, #tpu.memory_space<smem>>
    %c6_i32_18 = arith.constant 6 : i32
    %c0_i32_19 = arith.constant 0 : i32
    %58 = tpu.memref_slice %arg2[%55, %c0_i32_19] : memref<16x128xf32, #tpu.memory_space<any>> -> memref<1x128xf32, #tpu.memory_space<any>>
    %59 = tpu.memref_squeeze %58 : memref<1x128xf32, #tpu.memory_space<any>> -> memref<128xf32, #tpu.memory_space<any>>
    %c0_i32_20 = arith.constant 0 : i32
    %60 = tpu.memref_slice %arg4[%57, %c0_i32_20] : memref<64x128xf32, #tpu.memory_space<any>> -> memref<1x128xf32, #tpu.memory_space<any>>
    %61 = tpu.memref_squeeze %60 : memref<1x128xf32, #tpu.memory_space<any>> -> memref<128xf32, #tpu.memory_space<any>>
    %62 = tpu.memref_slice %arg5[%c6_i32_18] : memref<16x!tpu.dma_semaphore, #tpu.memory_space<semaphore_mem>> -> memref<1x!tpu.dma_semaphore, #tpu.memory_space<semaphore_mem>>
    %63 = tpu.memref_squeeze %62 : memref<1x!tpu.dma_semaphore, #tpu.memory_space<semaphore_mem>> -> memref<!tpu.dma_semaphore, #tpu.memory_space<semaphore_mem>>
    tpu.enqueue_dma source(%59 : memref<128xf32, #tpu.memory_space<any>>) target(%61 : memref<128xf32, #tpu.memory_space<any>>) target_semaphore(%63 : memref<!tpu.dma_semaphore, #tpu.memory_space<semaphore_mem>>)
    %c7_i32 = arith.constant 7 : i32
    %64 = arith.addi %0, %c7_i32 : i32
    %65 = arith.index_cast %64 : i32 to index
    %66 = memref.load %arg1[%65] : memref<16xi32, #tpu.memory_space<smem>>
    %c7_i32_21 = arith.constant 7 : i32
    %c0_i32_22 = arith.constant 0 : i32
    %67 = tpu.memref_slice %arg2[%64, %c0_i32_22] : memref<16x128xf32, #tpu.memory_space<any>> -> memref<1x128xf32, #tpu.memory_space<any>>
    %68 = tpu.memref_squeeze %67 : memref<1x128xf32, #tpu.memory_space<any>> -> memref<128xf32, #tpu.memory_space<any>>
    %c0_i32_23 = arith.constant 0 : i32
    %69 = tpu.memref_slice %arg4[%66, %c0_i32_23] : memref<64x128xf32, #tpu.memory_space<any>> -> memref<1x128xf32, #tpu.memory_space<any>>
    %70 = tpu.memref_squeeze %69 : memref<1x128xf32, #tpu.memory_space<any>> -> memref<128xf32, #tpu.memory_space<any>>
    %71 = tpu.memref_slice %arg5[%c7_i32_21] : memref<16x!tpu.dma_semaphore, #tpu.memory_space<semaphore_mem>> -> memref<1x!tpu.dma_semaphore, #tpu.memory_space<semaphore_mem>>
    %72 = tpu.memref_squeeze %71 : memref<1x!tpu.dma_semaphore, #tpu.memory_space<semaphore_mem>> -> memref<!tpu.dma_semaphore, #tpu.memory_space<semaphore_mem>>
    tpu.enqueue_dma source(%68 : memref<128xf32, #tpu.memory_space<any>>) target(%70 : memref<128xf32, #tpu.memory_space<any>>) target_semaphore(%72 : memref<!tpu.dma_semaphore, #tpu.memory_space<semaphore_mem>>)
    %c8_i32 = arith.constant 8 : i32
    %73 = arith.addi %0, %c8_i32 : i32
    %74 = arith.index_cast %73 : i32 to index
    %75 = memref.load %arg1[%74] : memref<16xi32, #tpu.memory_space<smem>>
    %c8_i32_24 = arith.constant 8 : i32
    %c0_i32_25 = arith.constant 0 : i32
    %76 = tpu.memref_slice %arg2[%73, %c0_i32_25] : memref<16x128xf32, #tpu.memory_space<any>> -> memref<1x128xf32, #tpu.memory_space<any>>
    %77 = tpu.memref_squeeze %76 : memref<1x128xf32, #tpu.memory_space<any>> -> memref<128xf32, #tpu.memory_space<any>>
    %c0_i32_26 = arith.constant 0 : i32
    %78 = tpu.memref_slice %arg4[%75, %c0_i32_26] : memref<64x128xf32, #tpu.memory_space<any>> -> memref<1x128xf32, #tpu.memory_space<any>>
    %79 = tpu.memref_squeeze %78 : memref<1x128xf32, #tpu.memory_space<any>> -> memref<128xf32, #tpu.memory_space<any>>
    %80 = tpu.memref_slice %arg5[%c8_i32_24] : memref<16x!tpu.dma_semaphore, #tpu.memory_space<semaphore_mem>> -> memref<1x!tpu.dma_semaphore, #tpu.memory_space<semaphore_mem>>
    %81 = tpu.memref_squeeze %80 : memref<1x!tpu.dma_semaphore, #tpu.memory_space<semaphore_mem>> -> memref<!tpu.dma_semaphore, #tpu.memory_space<semaphore_mem>>
    tpu.enqueue_dma source(%77 : memref<128xf32, #tpu.memory_space<any>>) target(%79 : memref<128xf32, #tpu.memory_space<any>>) target_semaphore(%81 : memref<!tpu.dma_semaphore, #tpu.memory_space<semaphore_mem>>)
    %c9_i32 = arith.constant 9 : i32
    %82 = arith.addi %0, %c9_i32 : i32
    %83 = arith.index_cast %82 : i32 to index
    %84 = memref.load %arg1[%83] : memref<16xi32, #tpu.memory_space<smem>>
    %c9_i32_27 = arith.constant 9 : i32
    %c0_i32_28 = arith.constant 0 : i32
    %85 = tpu.memref_slice %arg2[%82, %c0_i32_28] : memref<16x128xf32, #tpu.memory_space<any>> -> memref<1x128xf32, #tpu.memory_space<any>>
    %86 = tpu.memref_squeeze %85 : memref<1x128xf32, #tpu.memory_space<any>> -> memref<128xf32, #tpu.memory_space<any>>
    %c0_i32_29 = arith.constant 0 : i32
    %87 = tpu.memref_slice %arg4[%84, %c0_i32_29] : memref<64x128xf32, #tpu.memory_space<any>> -> memref<1x128xf32, #tpu.memory_space<any>>
    %88 = tpu.memref_squeeze %87 : memref<1x128xf32, #tpu.memory_space<any>> -> memref<128xf32, #tpu.memory_space<any>>
    %89 = tpu.memref_slice %arg5[%c9_i32_27] : memref<16x!tpu.dma_semaphore, #tpu.memory_space<semaphore_mem>> -> memref<1x!tpu.dma_semaphore, #tpu.memory_space<semaphore_mem>>
    %90 = tpu.memref_squeeze %89 : memref<1x!tpu.dma_semaphore, #tpu.memory_space<semaphore_mem>> -> memref<!tpu.dma_semaphore, #tpu.memory_space<semaphore_mem>>
    tpu.enqueue_dma source(%86 : memref<128xf32, #tpu.memory_space<any>>) target(%88 : memref<128xf32, #tpu.memory_space<any>>) target_semaphore(%90 : memref<!tpu.dma_semaphore, #tpu.memory_space<semaphore_mem>>)
    %c10_i32 = arith.constant 10 : i32
    %91 = arith.addi %0, %c10_i32 : i32
    %92 = arith.index_cast %91 : i32 to index
    %93 = memref.load %arg1[%92] : memref<16xi32, #tpu.memory_space<smem>>
    %c10_i32_30 = arith.constant 10 : i32
    %c0_i32_31 = arith.constant 0 : i32
    %94 = tpu.memref_slice %arg2[%91, %c0_i32_31] : memref<16x128xf32, #tpu.memory_space<any>> -> memref<1x128xf32, #tpu.memory_space<any>>
    %95 = tpu.memref_squeeze %94 : memref<1x128xf32, #tpu.memory_space<any>> -> memref<128xf32, #tpu.memory_space<any>>
    %c0_i32_32 = arith.constant 0 : i32
    %96 = tpu.memref_slice %arg4[%93, %c0_i32_32] : memref<64x128xf32, #tpu.memory_space<any>> -> memref<1x128xf32, #tpu.memory_space<any>>
    %97 = tpu.memref_squeeze %96 : memref<1x128xf32, #tpu.memory_space<any>> -> memref<128xf32, #tpu.memory_space<any>>
    %98 = tpu.memref_slice %arg5[%c10_i32_30] : memref<16x!tpu.dma_semaphore, #tpu.memory_space<semaphore_mem>> -> memref<1x!tpu.dma_semaphore, #tpu.memory_space<semaphore_mem>>
    %99 = tpu.memref_squeeze %98 : memref<1x!tpu.dma_semaphore, #tpu.memory_space<semaphore_mem>> -> memref<!tpu.dma_semaphore, #tpu.memory_space<semaphore_mem>>
    tpu.enqueue_dma source(%95 : memref<128xf32, #tpu.memory_space<any>>) target(%97 : memref<128xf32, #tpu.memory_space<any>>) target_semaphore(%99 : memref<!tpu.dma_semaphore, #tpu.memory_space<semaphore_mem>>)
    %c11_i32 = arith.constant 11 : i32
    %100 = arith.addi %0, %c11_i32 : i32
    %101 = arith.index_cast %100 : i32 to index
    %102 = memref.load %arg1[%101] : memref<16xi32, #tpu.memory_space<smem>>
    %c11_i32_33 = arith.constant 11 : i32
    %c0_i32_34 = arith.constant 0 : i32
    %103 = tpu.memref_slice %arg2[%100, %c0_i32_34] : memref<16x128xf32, #tpu.memory_space<any>> -> memref<1x128xf32, #tpu.memory_space<any>>
    %104 = tpu.memref_squeeze %103 : memref<1x128xf32, #tpu.memory_space<any>> -> memref<128xf32, #tpu.memory_space<any>>
    %c0_i32_35 = arith.constant 0 : i32
    %105 = tpu.memref_slice %arg4[%102, %c0_i32_35] : memref<64x128xf32, #tpu.memory_space<any>> -> memref<1x128xf32, #tpu.memory_space<any>>
    %106 = tpu.memref_squeeze %105 : memref<1x128xf32, #tpu.memory_space<any>> -> memref<128xf32, #tpu.memory_space<any>>
    %107 = tpu.memref_slice %arg5[%c11_i32_33] : memref<16x!tpu.dma_semaphore, #tpu.memory_space<semaphore_mem>> -> memref<1x!tpu.dma_semaphore, #tpu.memory_space<semaphore_mem>>
    %108 = tpu.memref_squeeze %107 : memref<1x!tpu.dma_semaphore, #tpu.memory_space<semaphore_mem>> -> memref<!tpu.dma_semaphore, #tpu.memory_space<semaphore_mem>>
    tpu.enqueue_dma source(%104 : memref<128xf32, #tpu.memory_space<any>>) target(%106 : memref<128xf32, #tpu.memory_space<any>>) target_semaphore(%108 : memref<!tpu.dma_semaphore, #tpu.memory_space<semaphore_mem>>)
    %c12_i32 = arith.constant 12 : i32
    %109 = arith.addi %0, %c12_i32 : i32
    %110 = arith.index_cast %109 : i32 to index
    %111 = memref.load %arg1[%110] : memref<16xi32, #tpu.memory_space<smem>>
    %c12_i32_36 = arith.constant 12 : i32
    %c0_i32_37 = arith.constant 0 : i32
    %112 = tpu.memref_slice %arg2[%109, %c0_i32_37] : memref<16x128xf32, #tpu.memory_space<any>> -> memref<1x128xf32, #tpu.memory_space<any>>
    %113 = tpu.memref_squeeze %112 : memref<1x128xf32, #tpu.memory_space<any>> -> memref<128xf32, #tpu.memory_space<any>>
    %c0_i32_38 = arith.constant 0 : i32
    %114 = tpu.memref_slice %arg4[%111, %c0_i32_38] : memref<64x128xf32, #tpu.memory_space<any>> -> memref<1x128xf32, #tpu.memory_space<any>>
    %115 = tpu.memref_squeeze %114 : memref<1x128xf32, #tpu.memory_space<any>> -> memref<128xf32, #tpu.memory_space<any>>
    %116 = tpu.memref_slice %arg5[%c12_i32_36] : memref<16x!tpu.dma_semaphore, #tpu.memory_space<semaphore_mem>> -> memref<1x!tpu.dma_semaphore, #tpu.memory_space<semaphore_mem>>
    %117 = tpu.memref_squeeze %116 : memref<1x!tpu.dma_semaphore, #tpu.memory_space<semaphore_mem>> -> memref<!tpu.dma_semaphore, #tpu.memory_space<semaphore_mem>>
    tpu.enqueue_dma source(%113 : memref<128xf32, #tpu.memory_space<any>>) target(%115 : memref<128xf32, #tpu.memory_space<any>>) target_semaphore(%117 : memref<!tpu.dma_semaphore, #tpu.memory_space<semaphore_mem>>)
    %c13_i32 = arith.constant 13 : i32
    %118 = arith.addi %0, %c13_i32 : i32
    %119 = arith.index_cast %118 : i32 to index
    %120 = memref.load %arg1[%119] : memref<16xi32, #tpu.memory_space<smem>>
    %c13_i32_39 = arith.constant 13 : i32
    %c0_i32_40 = arith.constant 0 : i32
    %121 = tpu.memref_slice %arg2[%118, %c0_i32_40] : memref<16x128xf32, #tpu.memory_space<any>> -> memref<1x128xf32, #tpu.memory_space<any>>
    %122 = tpu.memref_squeeze %121 : memref<1x128xf32, #tpu.memory_space<any>> -> memref<128xf32, #tpu.memory_space<any>>
    %c0_i32_41 = arith.constant 0 : i32
    %123 = tpu.memref_slice %arg4[%120, %c0_i32_41] : memref<64x128xf32, #tpu.memory_space<any>> -> memref<1x128xf32, #tpu.memory_space<any>>
    %124 = tpu.memref_squeeze %123 : memref<1x128xf32, #tpu.memory_space<any>> -> memref<128xf32, #tpu.memory_space<any>>
    %125 = tpu.memref_slice %arg5[%c13_i32_39] : memref<16x!tpu.dma_semaphore, #tpu.memory_space<semaphore_mem>> -> memref<1x!tpu.dma_semaphore, #tpu.memory_space<semaphore_mem>>
    %126 = tpu.memref_squeeze %125 : memref<1x!tpu.dma_semaphore, #tpu.memory_space<semaphore_mem>> -> memref<!tpu.dma_semaphore, #tpu.memory_space<semaphore_mem>>
    tpu.enqueue_dma source(%122 : memref<128xf32, #tpu.memory_space<any>>) target(%124 : memref<128xf32, #tpu.memory_space<any>>) target_semaphore(%126 : memref<!tpu.dma_semaphore, #tpu.memory_space<semaphore_mem>>)
    %c14_i32 = arith.constant 14 : i32
    %127 = arith.addi %0, %c14_i32 : i32
    %128 = arith.index_cast %127 : i32 to index
    %129 = memref.load %arg1[%128] : memref<16xi32, #tpu.memory_space<smem>>
    %c14_i32_42 = arith.constant 14 : i32
    %c0_i32_43 = arith.constant 0 : i32
    %130 = tpu.memref_slice %arg2[%127, %c0_i32_43] : memref<16x128xf32, #tpu.memory_space<any>> -> memref<1x128xf32, #tpu.memory_space<any>>
    %131 = tpu.memref_squeeze %130 : memref<1x128xf32, #tpu.memory_space<any>> -> memref<128xf32, #tpu.memory_space<any>>
    %c0_i32_44 = arith.constant 0 : i32
    %132 = tpu.memref_slice %arg4[%129, %c0_i32_44] : memref<64x128xf32, #tpu.memory_space<any>> -> memref<1x128xf32, #tpu.memory_space<any>>
    %133 = tpu.memref_squeeze %132 : memref<1x128xf32, #tpu.memory_space<any>> -> memref<128xf32, #tpu.memory_space<any>>
    %134 = tpu.memref_slice %arg5[%c14_i32_42] : memref<16x!tpu.dma_semaphore, #tpu.memory_space<semaphore_mem>> -> memref<1x!tpu.dma_semaphore, #tpu.memory_space<semaphore_mem>>
    %135 = tpu.memref_squeeze %134 : memref<1x!tpu.dma_semaphore, #tpu.memory_space<semaphore_mem>> -> memref<!tpu.dma_semaphore, #tpu.memory_space<semaphore_mem>>
    tpu.enqueue_dma source(%131 : memref<128xf32, #tpu.memory_space<any>>) target(%133 : memref<128xf32, #tpu.memory_space<any>>) target_semaphore(%135 : memref<!tpu.dma_semaphore, #tpu.memory_space<semaphore_mem>>)
    %c15_i32 = arith.constant 15 : i32
    %136 = arith.addi %0, %c15_i32 : i32
    %137 = arith.index_cast %136 : i32 to index
    %138 = memref.load %arg1[%137] : memref<16xi32, #tpu.memory_space<smem>>
    %c15_i32_45 = arith.constant 15 : i32
    %c0_i32_46 = arith.constant 0 : i32
    %139 = tpu.memref_slice %arg2[%136, %c0_i32_46] : memref<16x128xf32, #tpu.memory_space<any>> -> memref<1x128xf32, #tpu.memory_space<any>>
    %140 = tpu.memref_squeeze %139 : memref<1x128xf32, #tpu.memory_space<any>> -> memref<128xf32, #tpu.memory_space<any>>
    %c0_i32_47 = arith.constant 0 : i32
    %141 = tpu.memref_slice %arg4[%138, %c0_i32_47] : memref<64x128xf32, #tpu.memory_space<any>> -> memref<1x128xf32, #tpu.memory_space<any>>
    %142 = tpu.memref_squeeze %141 : memref<1x128xf32, #tpu.memory_space<any>> -> memref<128xf32, #tpu.memory_space<any>>
    %143 = tpu.memref_slice %arg5[%c15_i32_45] : memref<16x!tpu.dma_semaphore, #tpu.memory_space<semaphore_mem>> -> memref<1x!tpu.dma_semaphore, #tpu.memory_space<semaphore_mem>>
    %144 = tpu.memref_squeeze %143 : memref<1x!tpu.dma_semaphore, #tpu.memory_space<semaphore_mem>> -> memref<!tpu.dma_semaphore, #tpu.memory_space<semaphore_mem>>
    tpu.enqueue_dma source(%140 : memref<128xf32, #tpu.memory_space<any>>) target(%142 : memref<128xf32, #tpu.memory_space<any>>) target_semaphore(%144 : memref<!tpu.dma_semaphore, #tpu.memory_space<semaphore_mem>>)
    %c0_i32_48 = arith.constant 0 : i32
    %145 = arith.addi %0, %c0_i32_48 : i32
    %146 = arith.index_cast %145 : i32 to index
    %147 = memref.load %arg1[%146] : memref<16xi32, #tpu.memory_space<smem>>
    %c0_i32_49 = arith.constant 0 : i32
    %c0_i32_50 = arith.constant 0 : i32
    %148 = tpu.memref_slice %arg2[%145, %c0_i32_50] : memref<16x128xf32, #tpu.memory_space<any>> -> memref<1x128xf32, #tpu.memory_space<any>>
    %149 = tpu.memref_squeeze %148 : memref<1x128xf32, #tpu.memory_space<any>> -> memref<128xf32, #tpu.memory_space<any>>
    %c0_i32_51 = arith.constant 0 : i32
    %150 = tpu.memref_slice %arg4[%147, %c0_i32_51] : memref<64x128xf32, #tpu.memory_space<any>> -> memref<1x128xf32, #tpu.memory_space<any>>
    %151 = tpu.memref_squeeze %150 : memref<1x128xf32, #tpu.memory_space<any>> -> memref<128xf32, #tpu.memory_space<any>>
    %152 = tpu.memref_slice %arg5[%c0_i32_49] : memref<16x!tpu.dma_semaphore, #tpu.memory_space<semaphore_mem>> -> memref<1x!tpu.dma_semaphore, #tpu.memory_space<semaphore_mem>>
    %153 = tpu.memref_squeeze %152 : memref<1x!tpu.dma_semaphore, #tpu.memory_space<semaphore_mem>> -> memref<!tpu.dma_semaphore, #tpu.memory_space<semaphore_mem>>
    tpu.wait_dma2 semaphore(%153 : memref<!tpu.dma_semaphore, #tpu.memory_space<semaphore_mem>>) src(%149 : memref<128xf32, #tpu.memory_space<any>>) dst(%151 : memref<128xf32, #tpu.memory_space<any>>)
    %c1_i32_52 = arith.constant 1 : i32
    %154 = arith.addi %0, %c1_i32_52 : i32
    %155 = arith.index_cast %154 : i32 to index
    %156 = memref.load %arg1[%155] : memref<16xi32, #tpu.memory_space<smem>>
    %c1_i32_53 = arith.constant 1 : i32
    %c0_i32_54 = arith.constant 0 : i32
    %157 = tpu.memref_slice %arg2[%154, %c0_i32_54] : memref<16x128xf32, #tpu.memory_space<any>> -> memref<1x128xf32, #tpu.memory_space<any>>
    %158 = tpu.memref_squeeze %157 : memref<1x128xf32, #tpu.memory_space<any>> -> memref<128xf32, #tpu.memory_space<any>>
    %c0_i32_55 = arith.constant 0 : i32
    %159 = tpu.memref_slice %arg4[%156, %c0_i32_55] : memref<64x128xf32, #tpu.memory_space<any>> -> memref<1x128xf32, #tpu.memory_space<any>>
    %160 = tpu.memref_squeeze %159 : memref<1x128xf32, #tpu.memory_space<any>> -> memref<128xf32, #tpu.memory_space<any>>
    %161 = tpu.memref_slice %arg5[%c1_i32_53] : memref<16x!tpu.dma_semaphore, #tpu.memory_space<semaphore_mem>> -> memref<1x!tpu.dma_semaphore, #tpu.memory_space<semaphore_mem>>
    %162 = tpu.memref_squeeze %161 : memref<1x!tpu.dma_semaphore, #tpu.memory_space<semaphore_mem>> -> memref<!tpu.dma_semaphore, #tpu.memory_space<semaphore_mem>>
    tpu.wait_dma2 semaphore(%162 : memref<!tpu.dma_semaphore, #tpu.memory_space<semaphore_mem>>) src(%158 : memref<128xf32, #tpu.memory_space<any>>) dst(%160 : memref<128xf32, #tpu.memory_space<any>>)
    %c2_i32_56 = arith.constant 2 : i32
    %163 = arith.addi %0, %c2_i32_56 : i32
    %164 = arith.index_cast %163 : i32 to index
    %165 = memref.load %arg1[%164] : memref<16xi32, #tpu.memory_space<smem>>
    %c2_i32_57 = arith.constant 2 : i32
    %c0_i32_58 = arith.constant 0 : i32
    %166 = tpu.memref_slice %arg2[%163, %c0_i32_58] : memref<16x128xf32, #tpu.memory_space<any>> -> memref<1x128xf32, #tpu.memory_space<any>>
    %167 = tpu.memref_squeeze %166 : memref<1x128xf32, #tpu.memory_space<any>> -> memref<128xf32, #tpu.memory_space<any>>
    %c0_i32_59 = arith.constant 0 : i32
    %168 = tpu.memref_slice %arg4[%165, %c0_i32_59] : memref<64x128xf32, #tpu.memory_space<any>> -> memref<1x128xf32, #tpu.memory_space<any>>
    %169 = tpu.memref_squeeze %168 : memref<1x128xf32, #tpu.memory_space<any>> -> memref<128xf32, #tpu.memory_space<any>>
    %170 = tpu.memref_slice %arg5[%c2_i32_57] : memref<16x!tpu.dma_semaphore, #tpu.memory_space<semaphore_mem>> -> memref<1x!tpu.dma_semaphore, #tpu.memory_space<semaphore_mem>>
    %171 = tpu.memref_squeeze %170 : memref<1x!tpu.dma_semaphore, #tpu.memory_space<semaphore_mem>> -> memref<!tpu.dma_semaphore, #tpu.memory_space<semaphore_mem>>
    tpu.wait_dma2 semaphore(%171 : memref<!tpu.dma_semaphore, #tpu.memory_space<semaphore_mem>>) src(%167 : memref<128xf32, #tpu.memory_space<any>>) dst(%169 : memref<128xf32, #tpu.memory_space<any>>)
    %c3_i32_60 = arith.constant 3 : i32
    %172 = arith.addi %0, %c3_i32_60 : i32
    %173 = arith.index_cast %172 : i32 to index
    %174 = memref.load %arg1[%173] : memref<16xi32, #tpu.memory_space<smem>>
    %c3_i32_61 = arith.constant 3 : i32
    %c0_i32_62 = arith.constant 0 : i32
    %175 = tpu.memref_slice %arg2[%172, %c0_i32_62] : memref<16x128xf32, #tpu.memory_space<any>> -> memref<1x128xf32, #tpu.memory_space<any>>
    %176 = tpu.memref_squeeze %175 : memref<1x128xf32, #tpu.memory_space<any>> -> memref<128xf32, #tpu.memory_space<any>>
    %c0_i32_63 = arith.constant 0 : i32
    %177 = tpu.memref_slice %arg4[%174, %c0_i32_63] : memref<64x128xf32, #tpu.memory_space<any>> -> memref<1x128xf32, #tpu.memory_space<any>>
    %178 = tpu.memref_squeeze %177 : memref<1x128xf32, #tpu.memory_space<any>> -> memref<128xf32, #tpu.memory_space<any>>
    %179 = tpu.memref_slice %arg5[%c3_i32_61] : memref<16x!tpu.dma_semaphore, #tpu.memory_space<semaphore_mem>> -> memref<1x!tpu.dma_semaphore, #tpu.memory_space<semaphore_mem>>
    %180 = tpu.memref_squeeze %179 : memref<1x!tpu.dma_semaphore, #tpu.memory_space<semaphore_mem>> -> memref<!tpu.dma_semaphore, #tpu.memory_space<semaphore_mem>>
    tpu.wait_dma2 semaphore(%180 : memref<!tpu.dma_semaphore, #tpu.memory_space<semaphore_mem>>) src(%176 : memref<128xf32, #tpu.memory_space<any>>) dst(%178 : memref<128xf32, #tpu.memory_space<any>>)
    %c4_i32_64 = arith.constant 4 : i32
    %181 = arith.addi %0, %c4_i32_64 : i32
    %182 = arith.index_cast %181 : i32 to index
    %183 = memref.load %arg1[%182] : memref<16xi32, #tpu.memory_space<smem>>
    %c4_i32_65 = arith.constant 4 : i32
    %c0_i32_66 = arith.constant 0 : i32
    %184 = tpu.memref_slice %arg2[%181, %c0_i32_66] : memref<16x128xf32, #tpu.memory_space<any>> -> memref<1x128xf32, #tpu.memory_space<any>>
    %185 = tpu.memref_squeeze %184 : memref<1x128xf32, #tpu.memory_space<any>> -> memref<128xf32, #tpu.memory_space<any>>
    %c0_i32_67 = arith.constant 0 : i32
    %186 = tpu.memref_slice %arg4[%183, %c0_i32_67] : memref<64x128xf32, #tpu.memory_space<any>> -> memref<1x128xf32, #tpu.memory_space<any>>
    %187 = tpu.memref_squeeze %186 : memref<1x128xf32, #tpu.memory_space<any>> -> memref<128xf32, #tpu.memory_space<any>>
    %188 = tpu.memref_slice %arg5[%c4_i32_65] : memref<16x!tpu.dma_semaphore, #tpu.memory_space<semaphore_mem>> -> memref<1x!tpu.dma_semaphore, #tpu.memory_space<semaphore_mem>>
    %189 = tpu.memref_squeeze %188 : memref<1x!tpu.dma_semaphore, #tpu.memory_space<semaphore_mem>> -> memref<!tpu.dma_semaphore, #tpu.memory_space<semaphore_mem>>
    tpu.wait_dma2 semaphore(%189 : memref<!tpu.dma_semaphore, #tpu.memory_space<semaphore_mem>>) src(%185 : memref<128xf32, #tpu.memory_space<any>>) dst(%187 : memref<128xf32, #tpu.memory_space<any>>)
    %c5_i32_68 = arith.constant 5 : i32
    %190 = arith.addi %0, %c5_i32_68 : i32
    %191 = arith.index_cast %190 : i32 to index
    %192 = memref.load %arg1[%191] : memref<16xi32, #tpu.memory_space<smem>>
    %c5_i32_69 = arith.constant 5 : i32
    %c0_i32_70 = arith.constant 0 : i32
    %193 = tpu.memref_slice %arg2[%190, %c0_i32_70] : memref<16x128xf32, #tpu.memory_space<any>> -> memref<1x128xf32, #tpu.memory_space<any>>
    %194 = tpu.memref_squeeze %193 : memref<1x128xf32, #tpu.memory_space<any>> -> memref<128xf32, #tpu.memory_space<any>>
    %c0_i32_71 = arith.constant 0 : i32
    %195 = tpu.memref_slice %arg4[%192, %c0_i32_71] : memref<64x128xf32, #tpu.memory_space<any>> -> memref<1x128xf32, #tpu.memory_space<any>>
    %196 = tpu.memref_squeeze %195 : memref<1x128xf32, #tpu.memory_space<any>> -> memref<128xf32, #tpu.memory_space<any>>
    %197 = tpu.memref_slice %arg5[%c5_i32_69] : memref<16x!tpu.dma_semaphore, #tpu.memory_space<semaphore_mem>> -> memref<1x!tpu.dma_semaphore, #tpu.memory_space<semaphore_mem>>
    %198 = tpu.memref_squeeze %197 : memref<1x!tpu.dma_semaphore, #tpu.memory_space<semaphore_mem>> -> memref<!tpu.dma_semaphore, #tpu.memory_space<semaphore_mem>>
    tpu.wait_dma2 semaphore(%198 : memref<!tpu.dma_semaphore, #tpu.memory_space<semaphore_mem>>) src(%194 : memref<128xf32, #tpu.memory_space<any>>) dst(%196 : memref<128xf32, #tpu.memory_space<any>>)
    %c6_i32_72 = arith.constant 6 : i32
    %199 = arith.addi %0, %c6_i32_72 : i32
    %200 = arith.index_cast %199 : i32 to index
    %201 = memref.load %arg1[%200] : memref<16xi32, #tpu.memory_space<smem>>
    %c6_i32_73 = arith.constant 6 : i32
    %c0_i32_74 = arith.constant 0 : i32
    %202 = tpu.memref_slice %arg2[%199, %c0_i32_74] : memref<16x128xf32, #tpu.memory_space<any>> -> memref<1x128xf32, #tpu.memory_space<any>>
    %203 = tpu.memref_squeeze %202 : memref<1x128xf32, #tpu.memory_space<any>> -> memref<128xf32, #tpu.memory_space<any>>
    %c0_i32_75 = arith.constant 0 : i32
    %204 = tpu.memref_slice %arg4[%201, %c0_i32_75] : memref<64x128xf32, #tpu.memory_space<any>> -> memref<1x128xf32, #tpu.memory_space<any>>
    %205 = tpu.memref_squeeze %204 : memref<1x128xf32, #tpu.memory_space<any>> -> memref<128xf32, #tpu.memory_space<any>>
    %206 = tpu.memref_slice %arg5[%c6_i32_73] : memref<16x!tpu.dma_semaphore, #tpu.memory_space<semaphore_mem>> -> memref<1x!tpu.dma_semaphore, #tpu.memory_space<semaphore_mem>>
    %207 = tpu.memref_squeeze %206 : memref<1x!tpu.dma_semaphore, #tpu.memory_space<semaphore_mem>> -> memref<!tpu.dma_semaphore, #tpu.memory_space<semaphore_mem>>
    tpu.wait_dma2 semaphore(%207 : memref<!tpu.dma_semaphore, #tpu.memory_space<semaphore_mem>>) src(%203 : memref<128xf32, #tpu.memory_space<any>>) dst(%205 : memref<128xf32, #tpu.memory_space<any>>)
    %c7_i32_76 = arith.constant 7 : i32
    %208 = arith.addi %0, %c7_i32_76 : i32
    %209 = arith.index_cast %208 : i32 to index
    %210 = memref.load %arg1[%209] : memref<16xi32, #tpu.memory_space<smem>>
    %c7_i32_77 = arith.constant 7 : i32
    %c0_i32_78 = arith.constant 0 : i32
    %211 = tpu.memref_slice %arg2[%208, %c0_i32_78] : memref<16x128xf32, #tpu.memory_space<any>> -> memref<1x128xf32, #tpu.memory_space<any>>
    %212 = tpu.memref_squeeze %211 : memref<1x128xf32, #tpu.memory_space<any>> -> memref<128xf32, #tpu.memory_space<any>>
    %c0_i32_79 = arith.constant 0 : i32
    %213 = tpu.memref_slice %arg4[%210, %c0_i32_79] : memref<64x128xf32, #tpu.memory_space<any>> -> memref<1x128xf32, #tpu.memory_space<any>>
    %214 = tpu.memref_squeeze %213 : memref<1x128xf32, #tpu.memory_space<any>> -> memref<128xf32, #tpu.memory_space<any>>
    %215 = tpu.memref_slice %arg5[%c7_i32_77] : memref<16x!tpu.dma_semaphore, #tpu.memory_space<semaphore_mem>> -> memref<1x!tpu.dma_semaphore, #tpu.memory_space<semaphore_mem>>
    %216 = tpu.memref_squeeze %215 : memref<1x!tpu.dma_semaphore, #tpu.memory_space<semaphore_mem>> -> memref<!tpu.dma_semaphore, #tpu.memory_space<semaphore_mem>>
    tpu.wait_dma2 semaphore(%216 : memref<!tpu.dma_semaphore, #tpu.memory_space<semaphore_mem>>) src(%212 : memref<128xf32, #tpu.memory_space<any>>) dst(%214 : memref<128xf32, #tpu.memory_space<any>>)
    %c8_i32_80 = arith.constant 8 : i32
    %217 = arith.addi %0, %c8_i32_80 : i32
    %218 = arith.index_cast %217 : i32 to index
    %219 = memref.load %arg1[%218] : memref<16xi32, #tpu.memory_space<smem>>
    %c8_i32_81 = arith.constant 8 : i32
    %c0_i32_82 = arith.constant 0 : i32
    %220 = tpu.memref_slice %arg2[%217, %c0_i32_82] : memref<16x128xf32, #tpu.memory_space<any>> -> memref<1x128xf32, #tpu.memory_space<any>>
    %221 = tpu.memref_squeeze %220 : memref<1x128xf32, #tpu.memory_space<any>> -> memref<128xf32, #tpu.memory_space<any>>
    %c0_i32_83 = arith.constant 0 : i32
    %222 = tpu.memref_slice %arg4[%219, %c0_i32_83] : memref<64x128xf32, #tpu.memory_space<any>> -> memref<1x128xf32, #tpu.memory_space<any>>
    %223 = tpu.memref_squeeze %222 : memref<1x128xf32, #tpu.memory_space<any>> -> memref<128xf32, #tpu.memory_space<any>>
    %224 = tpu.memref_slice %arg5[%c8_i32_81] : memref<16x!tpu.dma_semaphore, #tpu.memory_space<semaphore_mem>> -> memref<1x!tpu.dma_semaphore, #tpu.memory_space<semaphore_mem>>
    %225 = tpu.memref_squeeze %224 : memref<1x!tpu.dma_semaphore, #tpu.memory_space<semaphore_mem>> -> memref<!tpu.dma_semaphore, #tpu.memory_space<semaphore_mem>>
    tpu.wait_dma2 semaphore(%225 : memref<!tpu.dma_semaphore, #tpu.memory_space<semaphore_mem>>) src(%221 : memref<128xf32, #tpu.memory_space<any>>) dst(%223 : memref<128xf32, #tpu.memory_space<any>>)
    %c9_i32_84 = arith.constant 9 : i32
    %226 = arith.addi %0, %c9_i32_84 : i32
    %227 = arith.index_cast %226 : i32 to index
    %228 = memref.load %arg1[%227] : memref<16xi32, #tpu.memory_space<smem>>
    %c9_i32_85 = arith.constant 9 : i32
    %c0_i32_86 = arith.constant 0 : i32
    %229 = tpu.memref_slice %arg2[%226, %c0_i32_86] : memref<16x128xf32, #tpu.memory_space<any>> -> memref<1x128xf32, #tpu.memory_space<any>>
    %230 = tpu.memref_squeeze %229 : memref<1x128xf32, #tpu.memory_space<any>> -> memref<128xf32, #tpu.memory_space<any>>
    %c0_i32_87 = arith.constant 0 : i32
    %231 = tpu.memref_slice %arg4[%228, %c0_i32_87] : memref<64x128xf32, #tpu.memory_space<any>> -> memref<1x128xf32, #tpu.memory_space<any>>
    %232 = tpu.memref_squeeze %231 : memref<1x128xf32, #tpu.memory_space<any>> -> memref<128xf32, #tpu.memory_space<any>>
    %233 = tpu.memref_slice %arg5[%c9_i32_85] : memref<16x!tpu.dma_semaphore, #tpu.memory_space<semaphore_mem>> -> memref<1x!tpu.dma_semaphore, #tpu.memory_space<semaphore_mem>>
    %234 = tpu.memref_squeeze %233 : memref<1x!tpu.dma_semaphore, #tpu.memory_space<semaphore_mem>> -> memref<!tpu.dma_semaphore, #tpu.memory_space<semaphore_mem>>
    tpu.wait_dma2 semaphore(%234 : memref<!tpu.dma_semaphore, #tpu.memory_space<semaphore_mem>>) src(%230 : memref<128xf32, #tpu.memory_space<any>>) dst(%232 : memref<128xf32, #tpu.memory_space<any>>)
    %c10_i32_88 = arith.constant 10 : i32
    %235 = arith.addi %0, %c10_i32_88 : i32
    %236 = arith.index_cast %235 : i32 to index
    %237 = memref.load %arg1[%236] : memref<16xi32, #tpu.memory_space<smem>>
    %c10_i32_89 = arith.constant 10 : i32
    %c0_i32_90 = arith.constant 0 : i32
    %238 = tpu.memref_slice %arg2[%235, %c0_i32_90] : memref<16x128xf32, #tpu.memory_space<any>> -> memref<1x128xf32, #tpu.memory_space<any>>
    %239 = tpu.memref_squeeze %238 : memref<1x128xf32, #tpu.memory_space<any>> -> memref<128xf32, #tpu.memory_space<any>>
    %c0_i32_91 = arith.constant 0 : i32
    %240 = tpu.memref_slice %arg4[%237, %c0_i32_91] : memref<64x128xf32, #tpu.memory_space<any>> -> memref<1x128xf32, #tpu.memory_space<any>>
    %241 = tpu.memref_squeeze %240 : memref<1x128xf32, #tpu.memory_space<any>> -> memref<128xf32, #tpu.memory_space<any>>
    %242 = tpu.memref_slice %arg5[%c10_i32_89] : memref<16x!tpu.dma_semaphore, #tpu.memory_space<semaphore_mem>> -> memref<1x!tpu.dma_semaphore, #tpu.memory_space<semaphore_mem>>
    %243 = tpu.memref_squeeze %242 : memref<1x!tpu.dma_semaphore, #tpu.memory_space<semaphore_mem>> -> memref<!tpu.dma_semaphore, #tpu.memory_space<semaphore_mem>>
    tpu.wait_dma2 semaphore(%243 : memref<!tpu.dma_semaphore, #tpu.memory_space<semaphore_mem>>) src(%239 : memref<128xf32, #tpu.memory_space<any>>) dst(%241 : memref<128xf32, #tpu.memory_space<any>>)
    %c11_i32_92 = arith.constant 11 : i32
    %244 = arith.addi %0, %c11_i32_92 : i32
    %245 = arith.index_cast %244 : i32 to index
    %246 = memref.load %arg1[%245] : memref<16xi32, #tpu.memory_space<smem>>
    %c11_i32_93 = arith.constant 11 : i32
    %c0_i32_94 = arith.constant 0 : i32
    %247 = tpu.memref_slice %arg2[%244, %c0_i32_94] : memref<16x128xf32, #tpu.memory_space<any>> -> memref<1x128xf32, #tpu.memory_space<any>>
    %248 = tpu.memref_squeeze %247 : memref<1x128xf32, #tpu.memory_space<any>> -> memref<128xf32, #tpu.memory_space<any>>
    %c0_i32_95 = arith.constant 0 : i32
    %249 = tpu.memref_slice %arg4[%246, %c0_i32_95] : memref<64x128xf32, #tpu.memory_space<any>> -> memref<1x128xf32, #tpu.memory_space<any>>
    %250 = tpu.memref_squeeze %249 : memref<1x128xf32, #tpu.memory_space<any>> -> memref<128xf32, #tpu.memory_space<any>>
    %251 = tpu.memref_slice %arg5[%c11_i32_93] : memref<16x!tpu.dma_semaphore, #tpu.memory_space<semaphore_mem>> -> memref<1x!tpu.dma_semaphore, #tpu.memory_space<semaphore_mem>>
    %252 = tpu.memref_squeeze %251 : memref<1x!tpu.dma_semaphore, #tpu.memory_space<semaphore_mem>> -> memref<!tpu.dma_semaphore, #tpu.memory_space<semaphore_mem>>
    tpu.wait_dma2 semaphore(%252 : memref<!tpu.dma_semaphore, #tpu.memory_space<semaphore_mem>>) src(%248 : memref<128xf32, #tpu.memory_space<any>>) dst(%250 : memref<128xf32, #tpu.memory_space<any>>)
    %c12_i32_96 = arith.constant 12 : i32
    %253 = arith.addi %0, %c12_i32_96 : i32
    %254 = arith.index_cast %253 : i32 to index
    %255 = memref.load %arg1[%254] : memref<16xi32, #tpu.memory_space<smem>>
    %c12_i32_97 = arith.constant 12 : i32
    %c0_i32_98 = arith.constant 0 : i32
    %256 = tpu.memref_slice %arg2[%253, %c0_i32_98] : memref<16x128xf32, #tpu.memory_space<any>> -> memref<1x128xf32, #tpu.memory_space<any>>
    %257 = tpu.memref_squeeze %256 : memref<1x128xf32, #tpu.memory_space<any>> -> memref<128xf32, #tpu.memory_space<any>>
    %c0_i32_99 = arith.constant 0 : i32
    %258 = tpu.memref_slice %arg4[%255, %c0_i32_99] : memref<64x128xf32, #tpu.memory_space<any>> -> memref<1x128xf32, #tpu.memory_space<any>>
    %259 = tpu.memref_squeeze %258 : memref<1x128xf32, #tpu.memory_space<any>> -> memref<128xf32, #tpu.memory_space<any>>
    %260 = tpu.memref_slice %arg5[%c12_i32_97] : memref<16x!tpu.dma_semaphore, #tpu.memory_space<semaphore_mem>> -> memref<1x!tpu.dma_semaphore, #tpu.memory_space<semaphore_mem>>
    %261 = tpu.memref_squeeze %260 : memref<1x!tpu.dma_semaphore, #tpu.memory_space<semaphore_mem>> -> memref<!tpu.dma_semaphore, #tpu.memory_space<semaphore_mem>>
    tpu.wait_dma2 semaphore(%261 : memref<!tpu.dma_semaphore, #tpu.memory_space<semaphore_mem>>) src(%257 : memref<128xf32, #tpu.memory_space<any>>) dst(%259 : memref<128xf32, #tpu.memory_space<any>>)
    %c13_i32_100 = arith.constant 13 : i32
    %262 = arith.addi %0, %c13_i32_100 : i32
    %263 = arith.index_cast %262 : i32 to index
    %264 = memref.load %arg1[%263] : memref<16xi32, #tpu.memory_space<smem>>
    %c13_i32_101 = arith.constant 13 : i32
    %c0_i32_102 = arith.constant 0 : i32
    %265 = tpu.memref_slice %arg2[%262, %c0_i32_102] : memref<16x128xf32, #tpu.memory_space<any>> -> memref<1x128xf32, #tpu.memory_space<any>>
    %266 = tpu.memref_squeeze %265 : memref<1x128xf32, #tpu.memory_space<any>> -> memref<128xf32, #tpu.memory_space<any>>
    %c0_i32_103 = arith.constant 0 : i32
    %267 = tpu.memref_slice %arg4[%264, %c0_i32_103] : memref<64x128xf32, #tpu.memory_space<any>> -> memref<1x128xf32, #tpu.memory_space<any>>
    %268 = tpu.memref_squeeze %267 : memref<1x128xf32, #tpu.memory_space<any>> -> memref<128xf32, #tpu.memory_space<any>>
    %269 = tpu.memref_slice %arg5[%c13_i32_101] : memref<16x!tpu.dma_semaphore, #tpu.memory_space<semaphore_mem>> -> memref<1x!tpu.dma_semaphore, #tpu.memory_space<semaphore_mem>>
    %270 = tpu.memref_squeeze %269 : memref<1x!tpu.dma_semaphore, #tpu.memory_space<semaphore_mem>> -> memref<!tpu.dma_semaphore, #tpu.memory_space<semaphore_mem>>
    tpu.wait_dma2 semaphore(%270 : memref<!tpu.dma_semaphore, #tpu.memory_space<semaphore_mem>>) src(%266 : memref<128xf32, #tpu.memory_space<any>>) dst(%268 : memref<128xf32, #tpu.memory_space<any>>)
    %c14_i32_104 = arith.constant 14 : i32
    %271 = arith.addi %0, %c14_i32_104 : i32
    %272 = arith.index_cast %271 : i32 to index
    %273 = memref.load %arg1[%272] : memref<16xi32, #tpu.memory_space<smem>>
    %c14_i32_105 = arith.constant 14 : i32
    %c0_i32_106 = arith.constant 0 : i32
    %274 = tpu.memref_slice %arg2[%271, %c0_i32_106] : memref<16x128xf32, #tpu.memory_space<any>> -> memref<1x128xf32, #tpu.memory_space<any>>
    %275 = tpu.memref_squeeze %274 : memref<1x128xf32, #tpu.memory_space<any>> -> memref<128xf32, #tpu.memory_space<any>>
    %c0_i32_107 = arith.constant 0 : i32
    %276 = tpu.memref_slice %arg4[%273, %c0_i32_107] : memref<64x128xf32, #tpu.memory_space<any>> -> memref<1x128xf32, #tpu.memory_space<any>>
    %277 = tpu.memref_squeeze %276 : memref<1x128xf32, #tpu.memory_space<any>> -> memref<128xf32, #tpu.memory_space<any>>
    %278 = tpu.memref_slice %arg5[%c14_i32_105] : memref<16x!tpu.dma_semaphore, #tpu.memory_space<semaphore_mem>> -> memref<1x!tpu.dma_semaphore, #tpu.memory_space<semaphore_mem>>
    %279 = tpu.memref_squeeze %278 : memref<1x!tpu.dma_semaphore, #tpu.memory_space<semaphore_mem>> -> memref<!tpu.dma_semaphore, #tpu.memory_space<semaphore_mem>>
    tpu.wait_dma2 semaphore(%279 : memref<!tpu.dma_semaphore, #tpu.memory_space<semaphore_mem>>) src(%275 : memref<128xf32, #tpu.memory_space<any>>) dst(%277 : memref<128xf32, #tpu.memory_space<any>>)
    %c15_i32_108 = arith.constant 15 : i32
    %280 = arith.addi %0, %c15_i32_108 : i32
    %281 = arith.index_cast %280 : i32 to index
    %282 = memref.load %arg1[%281] : memref<16xi32, #tpu.memory_space<smem>>
    %c15_i32_109 = arith.constant 15 : i32
    %c0_i32_110 = arith.constant 0 : i32
    %283 = tpu.memref_slice %arg2[%280, %c0_i32_110] : memref<16x128xf32, #tpu.memory_space<any>> -> memref<1x128xf32, #tpu.memory_space<any>>
    %284 = tpu.memref_squeeze %283 : memref<1x128xf32, #tpu.memory_space<any>> -> memref<128xf32, #tpu.memory_space<any>>
    %c0_i32_111 = arith.constant 0 : i32
    %285 = tpu.memref_slice %arg4[%282, %c0_i32_111] : memref<64x128xf32, #tpu.memory_space<any>> -> memref<1x128xf32, #tpu.memory_space<any>>
    %286 = tpu.memref_squeeze %285 : memref<1x128xf32, #tpu.memory_space<any>> -> memref<128xf32, #tpu.memory_space<any>>
    %287 = tpu.memref_slice %arg5[%c15_i32_109] : memref<16x!tpu.dma_semaphore, #tpu.memory_space<semaphore_mem>> -> memref<1x!tpu.dma_semaphore, #tpu.memory_space<semaphore_mem>>
    %288 = tpu.memref_squeeze %287 : memref<1x!tpu.dma_semaphore, #tpu.memory_space<semaphore_mem>> -> memref<!tpu.dma_semaphore, #tpu.memory_space<semaphore_mem>>
    tpu.wait_dma2 semaphore(%288 : memref<!tpu.dma_semaphore, #tpu.memory_space<semaphore_mem>>) src(%284 : memref<128xf32, #tpu.memory_space<any>>) dst(%286 : memref<128xf32, #tpu.memory_space<any>>)
    return
  }
}

</mosaic_0001>

<llo_original>
// kernel: unpool.1
$region0: #{unpool.1}
  #allocation0 [shape = 'u32[]', space=smem, size = 0x4, offset = 0x4, fixed_abs, tag = 'smem constant byte address 0x4 - core index']
  #allocation1 [shape = 'u32[144,128]{1,0:T(1,128)}', space=vmem, size = 0x12000, scoped, tag = 'internal scratch']
  #allocation2 [shape = 's32[16]{0}', space=sflag, size = 0x40, scoped, tag = 'scratch operand']
  #allocation3 [shape = 's32[1]{0}', space=sflag, size = 0x4, scoped, tag = 'scoped memory for unpool.1']
  #allocation4 [shape = 'u8[512]{0}', space=smem, size = 0x200, scoped, tag = 'prefetched SMEM operand 0']
  #allocation5 [shape = 's32[]', space=sflag, size = 0x4, offset = 0, fixed_abs, tag = 'sflag constant byte address 0x0 - dummy sync flag']
  #allocation6 [shape = 's32[]', space=sflag, size = 0x4, offset = 0, fixed_abs, tag = 'sflag constant byte address 0x0 - dummy sync flag']
  #allocation7 [shape = 's32[]', space=sflag, size = 0x4, offset = 0, fixed_abs, tag = 'sflag constant byte address 0x0 - dummy sync flag']
  #allocation8 [shape = 's32[]', space=sflag, size = 0x4, offset = 0, fixed_abs, tag = 'sflag constant byte address 0x0 - dummy sync flag']
  #allocation9 [shape = 's32[]', space=sflag, size = 0x4, offset = 0, fixed_abs, tag = 'sflag constant byte address 0x0 - dummy sync flag']
  #allocation10 [shape = 's32[]', space=sflag, size = 0x4, offset = 0, fixed_abs, tag = 'sflag constant byte address 0x0 - dummy sync flag']
  #allocation11 [shape = 's32[]', space=sflag, size = 0x4, offset = 0, fixed_abs, tag = 'sflag constant byte address 0x0 - dummy sync flag']
  #allocation12 [shape = 's32[]', space=sflag, size = 0x4, offset = 0, fixed_abs, tag = 'sflag constant byte address 0x0 - dummy sync flag']
  #allocation13 [shape = 's32[]', space=sflag, size = 0x4, offset = 0, fixed_abs, tag = 'sflag constant byte address 0x0 - dummy sync flag']
  #allocation14 [shape = 's32[]', space=sflag, size = 0x4, offset = 0, fixed_abs, tag = 'sflag constant byte address 0x0 - dummy sync flag']
  #allocation15 [shape = 's32[]', space=sflag, size = 0x4, offset = 0, fixed_abs, tag = 'sflag constant byte address 0x0 - dummy sync flag']
  #allocation16 [shape = 's32[]', space=sflag, size = 0x4, offset = 0, fixed_abs, tag = 'sflag constant byte address 0x0 - dummy sync flag']
  #allocation17 [shape = 's32[]', space=sflag, size = 0x4, offset = 0, fixed_abs, tag = 'sflag constant byte address 0x0 - dummy sync flag']
  #allocation18 [shape = 's32[]', space=sflag, size = 0x4, offset = 0, fixed_abs, tag = 'sflag constant byte address 0x0 - dummy sync flag']
  #allocation19 [shape = 's32[]', space=sflag, size = 0x4, offset = 0, fixed_abs, tag = 'sflag constant byte address 0x0 - dummy sync flag']
  #allocation20 [shape = 's32[]', space=sflag, size = 0x4, offset = 0, fixed_abs, tag = 'sflag constant byte address 0x0 - dummy sync flag']
  %s0 = inlined_call_operand.vmem [shape: s32[16], index: 0, kind: input, shape index: {}]
  %s1 = inlined_call_operand.vmem [shape: f32[16,128], index: 1, kind: input, shape index: {}]
  %s2 = inlined_call_operand.vmem [shape: f32[64,128], index: 2, kind: input, shape index: {}, may-alias: {2,3}]
  %s3 = inlined_call_operand.vmem [shape: f32[64,128], index: 3, kind: output, shape index: {}, may-alias: {2,3}]
  %s4 = sld [smem:[#allocation0]]
  $region482: #{unpool.1} parent=0
    _
  %s6 = ssub.s32 1, %s4
  %s7 = scalar_select 0, %s6, %s4
  %s8 = sshll.u32 %s0, 4
  %s9 = int_to_ptr.vmem [resolvable:$true] %s8
  %11 = dma.vmem_to_smem %s9, 16, [#allocation4], [#allocation3]
  %12 = dma.done [#allocation3], 16
  %13 = sfence
  %s14 = smul.u32 0, 16
  %s15 = sld [smem:[#allocation4 + %s14]]
  %s16 = scalar_lea.vmem %s1, %s14
  %s17 = scalar_lea.vmem %s3, %s15
  %p19 = scmp.lt.u32.totalorder 1, 8
  %p20 = pneg %p19
  // Predicated region
  $region2: #{unpool.1} parent=0 // pred_check
    _
  $region3: #{unpool.1} parent=0 // pred_check_branch
    %22 = sbr.rel (%p19) target = $region5
  $region4: #{unpool.1} parent=0 // pred_region
    %s38 = sand.u32 1, 7
    %p39 = scmp.eq.s32.totalorder %s38, 0
    %p40 = pneg %p39
    // Predicated region
    $region17: #{unpool.1} parent=4 // pred_check
      _
    $region18: #{unpool.1} parent=4 // pred_check_branch
      %42 = sbr.rel (%p39) target = $region20
    $region19: #{unpool.1} parent=4 // pred_region
      %s43 = sand.u32 1, 7
      %s44 = ssub.s32 1, %s43
      %s45 = scalar_lea.vmem %s16, %s44
      %s46 = ssub.s32 1, %s43
      %s47 = scalar_lea.vmem %s17, %s46
      %s48 = sshll.u32 1, %s43
      %s49 = ssub.s32 %s48, 1
      loop: start=0, step=1, limit=1
      $region21: #{unpool.1} parent=19 // loop_pre_header
        _
      $region22: #{unpool.1} parent=19 // loop_header
        %s51 = sphi 0, %s55
        %p52 = scmp.ge.s32.totalorder %s51, 1
        %s56 = sphi %s45, %s45
        %s57 = sphi %s47, %s47
      $region23: #{unpool.1} parent=19 // loop_header_branch
        %54 = sbr.rel (%p52) target = $region27
      $region24: #{unpool.1} parent=19 // loop_body
        %v58 = vld [vmem:[%s56] sm:%s49]
        %59 = vst [vmem:[%s57] sm:%s49] %v58
      $region25: #{unpool.1} parent=19 // loop_footer
        %s55 = sadd.s32 1, %s51
      $region26: #{unpool.1} parent=19 // loop_footer_branch
        %50 = sbr.rel target = $region22
      $region27: #{unpool.1} parent=19 // loop_exit
        _
    $region20: #{unpool.1} parent=4 // pred_fallthru
      _
  $region5: #{unpool.1} parent=0 // pred_fallthru
    _
  // Predicated region
  $region6: #{unpool.1} parent=0 // pred_check
    %p23 = pneg %p19
  $region7: #{unpool.1} parent=0 // pred_check_branch
    %25 = sbr.rel (%p23) target = $region9
  $region8: #{unpool.1} parent=0 // pred_region
    %s26 = sshll.u32 1, 1
    %s27 = ssub.s32 %s26, 1
    loop: start=0, step=1, limit=1
    $region10: #{unpool.1} parent=8 // loop_pre_header
      _
    $region11: #{unpool.1} parent=8 // loop_header
      %s29 = sphi 0, %s33
      %p30 = scmp.ge.s32.totalorder %s29, 1
      %s34 = sphi %s16, %s16
      %s35 = sphi %s17, %s17
    $region12: #{unpool.1} parent=8 // loop_header_branch
      %32 = sbr.rel (%p30) target = $region16
    $region13: #{unpool.1} parent=8 // loop_body
      %v36 = vld [vmem:[%s34] sm:%s27]
      %37 = vst [vmem:[%s35] sm:%s27] %v36
    $region14: #{unpool.1} parent=8 // loop_footer
      %s33 = sadd.s32 1, %s29
    $region15: #{unpool.1} parent=8 // loop_footer_branch
      %28 = sbr.rel target = $region11
    $region16: #{unpool.1} parent=8 // loop_exit
      _
  $region9: #{unpool.1} parent=0 // pred_fallthru
    _
  // Predicated region
  $region28: #{unpool.1} parent=0 // pred_check
    _
  $region29: #{unpool.1} parent=0 // pred_check_branch
    %62 = sbr.rel (0) target = $region31
  $region30: #{unpool.1} parent=0 // pred_region
    %63 = vsyncadd [#allocation2], 16
  $region31: #{unpool.1} parent=0 // pred_fallthru
    _
  %s64 = sadd.s32 %s14, 1
  %s65 = sld [smem:[#allocation4 + %s64]]
  %s66 = scalar_lea.vmem %s1, %s64
  %s67 = scalar_lea.vmem %s3, %s65
  %s68 = scalar_lea.sflag [#allocation2], 1
  %p70 = scmp.lt.u32.totalorder 1, 8
  %p71 = pneg %p70
  // Predicated region
  $region32: #{unpool.1} parent=0 // pred_check
    _
  $region33: #{unpool.1} parent=0 // pred_check_branch
    %73 = sbr.rel (%p70) target = $region35
  $region34: #{unpool.1} parent=0 // pred_region
    %s89 = sand.u32 1, 7
    %p90 = scmp.eq.s32.totalorder %s89, 0
    %p91 = pneg %p90
    // Predicated region
    $region47: #{unpool.1} parent=34 // pred_check
      _
    $region48: #{unpool.1} parent=34 // pred_check_branch
      %93 = sbr.rel (%p90) target = $region50
    $region49: #{unpool.1} parent=34 // pred_region
      %s94 = sand.u32 1, 7
      %s95 = ssub.s32 1, %s94
      %s96 = scalar_lea.vmem %s66, %s95
      %s97 = ssub.s32 1, %s94
      %s98 = scalar_lea.vmem %s67, %s97
      %s99 = sshll.u32 1, %s94
      %s100 = ssub.s32 %s99, 1
      loop: start=0, step=1, limit=1
      $region51: #{unpool.1} parent=49 // loop_pre_header
        _
      $region52: #{unpool.1} parent=49 // loop_header
        %s102 = sphi 0, %s106
        %p103 = scmp.ge.s32.totalorder %s102, 1
        %s107 = sphi %s96, %s96
        %s108 = sphi %s98, %s98
      $region53: #{unpool.1} parent=49 // loop_header_branch
        %105 = sbr.rel (%p103) target = $region57
      $region54: #{unpool.1} parent=49 // loop_body
        %v109 = vld [vmem:[%s107] sm:%s100]
        %110 = vst [vmem:[%s108] sm:%s100] %v109
      $region55: #{unpool.1} parent=49 // loop_footer
        %s106 = sadd.s32 1, %s102
      $region56: #{unpool.1} parent=49 // loop_footer_branch
        %101 = sbr.rel target = $region52
      $region57: #{unpool.1} parent=49 // loop_exit
        _
    $region50: #{unpool.1} parent=34 // pred_fallthru
      _
  $region35: #{unpool.1} parent=0 // pred_fallthru
    _
  // Predicated region
  $region36: #{unpool.1} parent=0 // pred_check
    %p74 = pneg %p70
  $region37: #{unpool.1} parent=0 // pred_check_branch
    %76 = sbr.rel (%p74) target = $region39
  $region38: #{unpool.1} parent=0 // pred_region
    %s77 = sshll.u32 1, 1
    %s78 = ssub.s32 %s77, 1
    loop: start=0, step=1, limit=1
    $region40: #{unpool.1} parent=38 // loop_pre_header
      _
    $region41: #{unpool.1} parent=38 // loop_header
      %s80 = sphi 0, %s84
      %p81 = scmp.ge.s32.totalorder %s80, 1
      %s85 = sphi %s66, %s66
      %s86 = sphi %s67, %s67
    $region42: #{unpool.1} parent=38 // loop_header_branch
      %83 = sbr.rel (%p81) target = $region46
    $region43: #{unpool.1} parent=38 // loop_body
      %v87 = vld [vmem:[%s85] sm:%s78]
      %88 = vst [vmem:[%s86] sm:%s78] %v87
    $region44: #{unpool.1} parent=38 // loop_footer
      %s84 = sadd.s32 1, %s80
    $region45: #{unpool.1} parent=38 // loop_footer_branch
      %79 = sbr.rel target = $region41
    $region46: #{unpool.1} parent=38 // loop_exit
      _
  $region39: #{unpool.1} parent=0 // pred_fallthru
    _
  // Predicated region
  $region58: #{unpool.1} parent=0 // pred_check
    _
  $region59: #{unpool.1} parent=0 // pred_check_branch
    %113 = sbr.rel (0) target = $region61
  $region60: #{unpool.1} parent=0 // pred_region
    %114 = vsyncadd %s68, 16
  $region61: #{unpool.1} parent=0 // pred_fallthru
    _
  %s115 = sadd.s32 %s14, 2
  %s116 = sld [smem:[#allocation4 + %s115]]
  %s117 = scalar_lea.vmem %s1, %s115
  %s118 = scalar_lea.vmem %s3, %s116
  %s119 = scalar_lea.sflag [#allocation2], 2
  %p121 = scmp.lt.u32.totalorder 1, 8
  %p122 = pneg %p121
  // Predicated region
  $region62: #{unpool.1} parent=0 // pred_check
    _
  $region63: #{unpool.1} parent=0 // pred_check_branch
    %124 = sbr.rel (%p121) target = $region65
  $region64: #{unpool.1} parent=0 // pred_region
    %s140 = sand.u32 1, 7
    %p141 = scmp.eq.s32.totalorder %s140, 0
    %p142 = pneg %p141
    // Predicated region
    $region77: #{unpool.1} parent=64 // pred_check
      _
    $region78: #{unpool.1} parent=64 // pred_check_branch
      %144 = sbr.rel (%p141) target = $region80
    $region79: #{unpool.1} parent=64 // pred_region
      %s145 = sand.u32 1, 7
      %s146 = ssub.s32 1, %s145
      %s147 = scalar_lea.vmem %s117, %s146
      %s148 = ssub.s32 1, %s145
      %s149 = scalar_lea.vmem %s118, %s148
      %s150 = sshll.u32 1, %s145
      %s151 = ssub.s32 %s150, 1
      loop: start=0, step=1, limit=1
      $region81: #{unpool.1} parent=79 // loop_pre_header
        _
      $region82: #{unpool.1} parent=79 // loop_header
        %s153 = sphi 0, %s157
        %p154 = scmp.ge.s32.totalorder %s153, 1
        %s158 = sphi %s147, %s147
        %s159 = sphi %s149, %s149
      $region83: #{unpool.1} parent=79 // loop_header_branch
        %156 = sbr.rel (%p154) target = $region87
      $region84: #{unpool.1} parent=79 // loop_body
        %v160 = vld [vmem:[%s158] sm:%s151]
        %161 = vst [vmem:[%s159] sm:%s151] %v160
      $region85: #{unpool.1} parent=79 // loop_footer
        %s157 = sadd.s32 1, %s153
      $region86: #{unpool.1} parent=79 // loop_footer_branch
        %152 = sbr.rel target = $region82
      $region87: #{unpool.1} parent=79 // loop_exit
        _
    $region80: #{unpool.1} parent=64 // pred_fallthru
      _
  $region65: #{unpool.1} parent=0 // pred_fallthru
    _
  // Predicated region
  $region66: #{unpool.1} parent=0 // pred_check
    %p125 = pneg %p121
  $region67: #{unpool.1} parent=0 // pred_check_branch
    %127 = sbr.rel (%p125) target = $region69
  $region68: #{unpool.1} parent=0 // pred_region
    %s128 = sshll.u32 1, 1
    %s129 = ssub.s32 %s128, 1
    loop: start=0, step=1, limit=1
    $region70: #{unpool.1} parent=68 // loop_pre_header
      _
    $region71: #{unpool.1} parent=68 // loop_header
      %s131 = sphi 0, %s135
      %p132 = scmp.ge.s32.totalorder %s131, 1
      %s136 = sphi %s117, %s117
      %s137 = sphi %s118, %s118
    $region72: #{unpool.1} parent=68 // loop_header_branch
      %134 = sbr.rel (%p132) target = $region76
    $region73: #{unpool.1} parent=68 // loop_body
      %v138 = vld [vmem:[%s136] sm:%s129]
      %139 = vst [vmem:[%s137] sm:%s129] %v138
    $region74: #{unpool.1} parent=68 // loop_footer
      %s135 = sadd.s32 1, %s131
    $region75: #{unpool.1} parent=68 // loop_footer_branch
      %130 = sbr.rel target = $region71
    $region76: #{unpool.1} parent=68 // loop_exit
      _
  $region69: #{unpool.1} parent=0 // pred_fallthru
    _
  // Predicated region
  $region88: #{unpool.1} parent=0 // pred_check
    _
  $region89: #{unpool.1} parent=0 // pred_check_branch
    %164 = sbr.rel (0) target = $region91
  $region90: #{unpool.1} parent=0 // pred_region
    %165 = vsyncadd %s119, 16
  $region91: #{unpool.1} parent=0 // pred_fallthru
    _
  %s166 = sadd.s32 %s14, 3
  %s167 = sld [smem:[#allocation4 + %s166]]
  %s168 = scalar_lea.vmem %s1, %s166
  %s169 = scalar_lea.vmem %s3, %s167
  %s170 = scalar_lea.sflag [#allocation2], 3
  %p172 = scmp.lt.u32.totalorder 1, 8
  %p173 = pneg %p172
  // Predicated region
  $region92: #{unpool.1} parent=0 // pred_check
    _
  $region93: #{unpool.1} parent=0 // pred_check_branch
    %175 = sbr.rel (%p172) target = $region95
  $region94: #{unpool.1} parent=0 // pred_region
    %s191 = sand.u32 1, 7
    %p192 = scmp.eq.s32.totalorder %s191, 0
    %p193 = pneg %p192
    // Predicated region
    $region107: #{unpool.1} parent=94 // pred_check
      _
    $region108: #{unpool.1} parent=94 // pred_check_branch
      %195 = sbr.rel (%p192) target = $region110
    $region109: #{unpool.1} parent=94 // pred_region
      %s196 = sand.u32 1, 7
      %s197 = ssub.s32 1, %s196
      %s198 = scalar_lea.vmem %s168, %s197
      %s199 = ssub.s32 1, %s196
      %s200 = scalar_lea.vmem %s169, %s199
      %s201 = sshll.u32 1, %s196
      %s202 = ssub.s32 %s201, 1
      loop: start=0, step=1, limit=1
      $region111: #{unpool.1} parent=109 // loop_pre_header
        _
      $region112: #{unpool.1} parent=109 // loop_header
        %s204 = sphi 0, %s208
        %p205 = scmp.ge.s32.totalorder %s204, 1
        %s209 = sphi %s198, %s198
        %s210 = sphi %s200, %s200
      $region113: #{unpool.1} parent=109 // loop_header_branch
        %207 = sbr.rel (%p205) target = $region117
      $region114: #{unpool.1} parent=109 // loop_body
        %v211 = vld [vmem:[%s209] sm:%s202]
        %212 = vst [vmem:[%s210] sm:%s202] %v211
      $region115: #{unpool.1} parent=109 // loop_footer
        %s208 = sadd.s32 1, %s204
      $region116: #{unpool.1} parent=109 // loop_footer_branch
        %203 = sbr.rel target = $region112
      $region117: #{unpool.1} parent=109 // loop_exit
        _
    $region110: #{unpool.1} parent=94 // pred_fallthru
      _
  $region95: #{unpool.1} parent=0 // pred_fallthru
    _
  // Predicated region
  $region96: #{unpool.1} parent=0 // pred_check
    %p176 = pneg %p172
  $region97: #{unpool.1} parent=0 // pred_check_branch
    %178 = sbr.rel (%p176) target = $region99
  $region98: #{unpool.1} parent=0 // pred_region
    %s179 = sshll.u32 1, 1
    %s180 = ssub.s32 %s179, 1
    loop: start=0, step=1, limit=1
    $region100: #{unpool.1} parent=98 // loop_pre_header
      _
    $region101: #{unpool.1} parent=98 // loop_header
      %s182 = sphi 0, %s186
      %p183 = scmp.ge.s32.totalorder %s182, 1
      %s187 = sphi %s168, %s168
      %s188 = sphi %s169, %s169
    $region102: #{unpool.1} parent=98 // loop_header_branch
      %185 = sbr.rel (%p183) target = $region106
    $region103: #{unpool.1} parent=98 // loop_body
      %v189 = vld [vmem:[%s187] sm:%s180]
      %190 = vst [vmem:[%s188] sm:%s180] %v189
    $region104: #{unpool.1} parent=98 // loop_footer
      %s186 = sadd.s32 1, %s182
    $region105: #{unpool.1} parent=98 // loop_footer_branch
      %181 = sbr.rel target = $region101
    $region106: #{unpool.1} parent=98 // loop_exit
      _
  $region99: #{unpool.1} parent=0 // pred_fallthru
    _
  // Predicated region
  $region118: #{unpool.1} parent=0 // pred_check
    _
  $region119: #{unpool.1} parent=0 // pred_check_branch
    %215 = sbr.rel (0) target = $region121
  $region120: #{unpool.1} parent=0 // pred_region
    %216 = vsyncadd %s170, 16
  $region121: #{unpool.1} parent=0 // pred_fallthru
    _
  %s217 = sadd.s32 %s14, 4
  %s218 = sld [smem:[#allocation4 + %s217]]
  %s219 = scalar_lea.vmem %s1, %s217
  %s220 = scalar_lea.vmem %s3, %s218
  %s221 = scalar_lea.sflag [#allocation2], 4
  %p223 = scmp.lt.u32.totalorder 1, 8
  %p224 = pneg %p223
  // Predicated region
  $region122: #{unpool.1} parent=0 // pred_check
    _
  $region123: #{unpool.1} parent=0 // pred_check_branch
    %226 = sbr.rel (%p223) target = $region125
  $region124: #{unpool.1} parent=0 // pred_region
    %s242 = sand.u32 1, 7
    %p243 = scmp.eq.s32.totalorder %s242, 0
    %p244 = pneg %p243
    // Predicated region
    $region137: #{unpool.1} parent=124 // pred_check
      _
    $region138: #{unpool.1} parent=124 // pred_check_branch
      %246 = sbr.rel (%p243) target = $region140
    $region139: #{unpool.1} parent=124 // pred_region
      %s247 = sand.u32 1, 7
      %s248 = ssub.s32 1, %s247
      %s249 = scalar_lea.vmem %s219, %s248
      %s250 = ssub.s32 1, %s247
      %s251 = scalar_lea.vmem %s220, %s250
      %s252 = sshll.u32 1, %s247
      %s253 = ssub.s32 %s252, 1
      loop: start=0, step=1, limit=1
      $region141: #{unpool.1} parent=139 // loop_pre_header
        _
      $region142: #{unpool.1} parent=139 // loop_header
        %s255 = sphi 0, %s259
        %p256 = scmp.ge.s32.totalorder %s255, 1
        %s260 = sphi %s249, %s249
        %s261 = sphi %s251, %s251
      $region143: #{unpool.1} parent=139 // loop_header_branch
        %258 = sbr.rel (%p256) target = $region147
      $region144: #{unpool.1} parent=139 // loop_body
        %v262 = vld [vmem:[%s260] sm:%s253]
        %263 = vst [vmem:[%s261] sm:%s253] %v262
      $region145: #{unpool.1} parent=139 // loop_footer
        %s259 = sadd.s32 1, %s255
      $region146: #{unpool.1} parent=139 // loop_footer_branch
        %254 = sbr.rel target = $region142
      $region147: #{unpool.1} parent=139 // loop_exit
        _
    $region140: #{unpool.1} parent=124 // pred_fallthru
      _
  $region125: #{unpool.1} parent=0 // pred_fallthru
    _
  // Predicated region
  $region126: #{unpool.1} parent=0 // pred_check
    %p227 = pneg %p223
  $region127: #{unpool.1} parent=0 // pred_check_branch
    %229 = sbr.rel (%p227) target = $region129
  $region128: #{unpool.1} parent=0 // pred_region
    %s230 = sshll.u32 1, 1
    %s231 = ssub.s32 %s230, 1
    loop: start=0, step=1, limit=1
    $region130: #{unpool.1} parent=128 // loop_pre_header
      _
    $region131: #{unpool.1} parent=128 // loop_header
      %s233 = sphi 0, %s237
      %p234 = scmp.ge.s32.totalorder %s233, 1
      %s238 = sphi %s219, %s219
      %s239 = sphi %s220, %s220
    $region132: #{unpool.1} parent=128 // loop_header_branch
      %236 = sbr.rel (%p234) target = $region136
    $region133: #{unpool.1} parent=128 // loop_body
      %v240 = vld [vmem:[%s238] sm:%s231]
      %241 = vst [vmem:[%s239] sm:%s231] %v240
    $region134: #{unpool.1} parent=128 // loop_footer
      %s237 = sadd.s32 1, %s233
    $region135: #{unpool.1} parent=128 // loop_footer_branch
      %232 = sbr.rel target = $region131
    $region136: #{unpool.1} parent=128 // loop_exit
      _
  $region129: #{unpool.1} parent=0 // pred_fallthru
    _
  // Predicated region
  $region148: #{unpool.1} parent=0 // pred_check
    _
  $region149: #{unpool.1} parent=0 // pred_check_branch
    %266 = sbr.rel (0) target = $region151
  $region150: #{unpool.1} parent=0 // pred_region
    %267 = vsyncadd %s221, 16
  $region151: #{unpool.1} parent=0 // pred_fallthru
    _
  %s268 = sadd.s32 %s14, 5
  %s269 = sld [smem:[#allocation4 + %s268]]
  %s270 = scalar_lea.vmem %s1, %s268
  %s271 = scalar_lea.vmem %s3, %s269
  %s272 = scalar_lea.sflag [#allocation2], 5
  %p274 = scmp.lt.u32.totalorder 1, 8
  %p275 = pneg %p274
  // Predicated region
  $region152: #{unpool.1} parent=0 // pred_check
    _
  $region153: #{unpool.1} parent=0 // pred_check_branch
    %277 = sbr.rel (%p274) target = $region155
  $region154: #{unpool.1} parent=0 // pred_region
    %s293 = sand.u32 1, 7
    %p294 = scmp.eq.s32.totalorder %s293, 0
    %p295 = pneg %p294
    // Predicated region
    $region167: #{unpool.1} parent=154 // pred_check
      _
    $region168: #{unpool.1} parent=154 // pred_check_branch
      %297 = sbr.rel (%p294) target = $region170
    $region169: #{unpool.1} parent=154 // pred_region
      %s298 = sand.u32 1, 7
      %s299 = ssub.s32 1, %s298
      %s300 = scalar_lea.vmem %s270, %s299
      %s301 = ssub.s32 1, %s298
      %s302 = scalar_lea.vmem %s271, %s301
      %s303 = sshll.u32 1, %s298
      %s304 = ssub.s32 %s303, 1
      loop: start=0, step=1, limit=1
      $region171: #{unpool.1} parent=169 // loop_pre_header
        _
      $region172: #{unpool.1} parent=169 // loop_header
        %s306 = sphi 0, %s310
        %p307 = scmp.ge.s32.totalorder %s306, 1
        %s311 = sphi %s300, %s300
        %s312 = sphi %s302, %s302
      $region173: #{unpool.1} parent=169 // loop_header_branch
        %309 = sbr.rel (%p307) target = $region177
      $region174: #{unpool.1} parent=169 // loop_body
        %v313 = vld [vmem:[%s311] sm:%s304]
        %314 = vst [vmem:[%s312] sm:%s304] %v313
      $region175: #{unpool.1} parent=169 // loop_footer
        %s310 = sadd.s32 1, %s306
      $region176: #{unpool.1} parent=169 // loop_footer_branch
        %305 = sbr.rel target = $region172
      $region177: #{unpool.1} parent=169 // loop_exit
        _
    $region170: #{unpool.1} parent=154 // pred_fallthru
      _
  $region155: #{unpool.1} parent=0 // pred_fallthru
    _
  // Predicated region
  $region156: #{unpool.1} parent=0 // pred_check
    %p278 = pneg %p274
  $region157: #{unpool.1} parent=0 // pred_check_branch
    %280 = sbr.rel (%p278) target = $region159
  $region158: #{unpool.1} parent=0 // pred_region
    %s281 = sshll.u32 1, 1
    %s282 = ssub.s32 %s281, 1
    loop: start=0, step=1, limit=1
    $region160: #{unpool.1} parent=158 // loop_pre_header
      _
    $region161: #{unpool.1} parent=158 // loop_header
      %s284 = sphi 0, %s288
      %p285 = scmp.ge.s32.totalorder %s284, 1
      %s289 = sphi %s270, %s270
      %s290 = sphi %s271, %s271
    $region162: #{unpool.1} parent=158 // loop_header_branch
      %287 = sbr.rel (%p285) target = $region166
    $region163: #{unpool.1} parent=158 // loop_body
      %v291 = vld [vmem:[%s289] sm:%s282]
      %292 = vst [vmem:[%s290] sm:%s282] %v291
    $region164: #{unpool.1} parent=158 // loop_footer
      %s288 = sadd.s32 1, %s284
    $region165: #{unpool.1} parent=158 // loop_footer_branch
      %283 = sbr.rel target = $region161
    $region166: #{unpool.1} parent=158 // loop_exit
      _
  $region159: #{unpool.1} parent=0 // pred_fallthru
    _
  // Predicated region
  $region178: #{unpool.1} parent=0 // pred_check
    _
  $region179: #{unpool.1} parent=0 // pred_check_branch
    %317 = sbr.rel (0) target = $region181
  $region180: #{unpool.1} parent=0 // pred_region
    %318 = vsyncadd %s272, 16
  $region181: #{unpool.1} parent=0 // pred_fallthru
    _
  %s319 = sadd.s32 %s14, 6
  %s320 = sld [smem:[#allocation4 + %s319]]
  %s321 = scalar_lea.vmem %s1, %s319
  %s322 = scalar_lea.vmem %s3, %s320
  %s323 = scalar_lea.sflag [#allocation2], 6
  %p325 = scmp.lt.u32.totalorder 1, 8
  %p326 = pneg %p325
  // Predicated region
  $region182: #{unpool.1} parent=0 // pred_check
    _
  $region183: #{unpool.1} parent=0 // pred_check_branch
    %328 = sbr.rel (%p325) target = $region185
  $region184: #{unpool.1} parent=0 // pred_region
    %s344 = sand.u32 1, 7
    %p345 = scmp.eq.s32.totalorder %s344, 0
    %p346 = pneg %p345
    // Predicated region
    $region197: #{unpool.1} parent=184 // pred_check
      _
    $region198: #{unpool.1} parent=184 // pred_check_branch
      %348 = sbr.rel (%p345) target = $region200
    $region199: #{unpool.1} parent=184 // pred_region
      %s349 = sand.u32 1, 7
      %s350 = ssub.s32 1, %s349
      %s351 = scalar_lea.vmem %s321, %s350
      %s352 = ssub.s32 1, %s349
      %s353 = scalar_lea.vmem %s322, %s352
      %s354 = sshll.u32 1, %s349
      %s355 = ssub.s32 %s354, 1
      loop: start=0, step=1, limit=1
      $region201: #{unpool.1} parent=199 // loop_pre_header
        _
      $region202: #{unpool.1} parent=199 // loop_header
        %s357 = sphi 0, %s361
        %p358 = scmp.ge.s32.totalorder %s357, 1
        %s362 = sphi %s351, %s351
        %s363 = sphi %s353, %s353
      $region203: #{unpool.1} parent=199 // loop_header_branch
        %360 = sbr.rel (%p358) target = $region207
      $region204: #{unpool.1} parent=199 // loop_body
        %v364 = vld [vmem:[%s362] sm:%s355]
        %365 = vst [vmem:[%s363] sm:%s355] %v364
      $region205: #{unpool.1} parent=199 // loop_footer
        %s361 = sadd.s32 1, %s357
      $region206: #{unpool.1} parent=199 // loop_footer_branch
        %356 = sbr.rel target = $region202
      $region207: #{unpool.1} parent=199 // loop_exit
        _
    $region200: #{unpool.1} parent=184 // pred_fallthru
      _
  $region185: #{unpool.1} parent=0 // pred_fallthru
    _
  // Predicated region
  $region186: #{unpool.1} parent=0 // pred_check
    %p329 = pneg %p325
  $region187: #{unpool.1} parent=0 // pred_check_branch
    %331 = sbr.rel (%p329) target = $region189
  $region188: #{unpool.1} parent=0 // pred_region
    %s332 = sshll.u32 1, 1
    %s333 = ssub.s32 %s332, 1
    loop: start=0, step=1, limit=1
    $region190: #{unpool.1} parent=188 // loop_pre_header
      _
    $region191: #{unpool.1} parent=188 // loop_header
      %s335 = sphi 0, %s339
      %p336 = scmp.ge.s32.totalorder %s335, 1
      %s340 = sphi %s321, %s321
      %s341 = sphi %s322, %s322
    $region192: #{unpool.1} parent=188 // loop_header_branch
      %338 = sbr.rel (%p336) target = $region196
    $region193: #{unpool.1} parent=188 // loop_body
      %v342 = vld [vmem:[%s340] sm:%s333]
      %343 = vst [vmem:[%s341] sm:%s333] %v342
    $region194: #{unpool.1} parent=188 // loop_footer
      %s339 = sadd.s32 1, %s335
    $region195: #{unpool.1} parent=188 // loop_footer_branch
      %334 = sbr.rel target = $region191
    $region196: #{unpool.1} parent=188 // loop_exit
      _
  $region189: #{unpool.1} parent=0 // pred_fallthru
    _
  // Predicated region
  $region208: #{unpool.1} parent=0 // pred_check
    _
  $region209: #{unpool.1} parent=0 // pred_check_branch
    %368 = sbr.rel (0) target = $region211
  $region210: #{unpool.1} parent=0 // pred_region
    %369 = vsyncadd %s323, 16
  $region211: #{unpool.1} parent=0 // pred_fallthru
    _
  %s370 = sadd.s32 %s14, 7
  %s371 = sld [smem:[#allocation4 + %s370]]
  %s372 = scalar_lea.vmem %s1, %s370
  %s373 = scalar_lea.vmem %s3, %s371
  %s374 = scalar_lea.sflag [#allocation2], 7
  %p376 = scmp.lt.u32.totalorder 1, 8
  %p377 = pneg %p376
  // Predicated region
  $region212: #{unpool.1} parent=0 // pred_check
    _
  $region213: #{unpool.1} parent=0 // pred_check_branch
    %379 = sbr.rel (%p376) target = $region215
  $region214: #{unpool.1} parent=0 // pred_region
    %s395 = sand.u32 1, 7
    %p396 = scmp.eq.s32.totalorder %s395, 0
    %p397 = pneg %p396
    // Predicated region
    $region227: #{unpool.1} parent=214 // pred_check
      _
    $region228: #{unpool.1} parent=214 // pred_check_branch
      %399 = sbr.rel (%p396) target = $region230
    $region229: #{unpool.1} parent=214 // pred_region
      %s400 = sand.u32 1, 7
      %s401 = ssub.s32 1, %s400
      %s402 = scalar_lea.vmem %s372, %s401
      %s403 = ssub.s32 1, %s400
      %s404 = scalar_lea.vmem %s373, %s403
      %s405 = sshll.u32 1, %s400
      %s406 = ssub.s32 %s405, 1
      loop: start=0, step=1, limit=1
      $region231: #{unpool.1} parent=229 // loop_pre_header
        _
      $region232: #{unpool.1} parent=229 // loop_header
        %s408 = sphi 0, %s412
        %p409 = scmp.ge.s32.totalorder %s408, 1
        %s413 = sphi %s402, %s402
        %s414 = sphi %s404, %s404
      $region233: #{unpool.1} parent=229 // loop_header_branch
        %411 = sbr.rel (%p409) target = $region237
      $region234: #{unpool.1} parent=229 // loop_body
        %v415 = vld [vmem:[%s413] sm:%s406]
        %416 = vst [vmem:[%s414] sm:%s406] %v415
      $region235: #{unpool.1} parent=229 // loop_footer
        %s412 = sadd.s32 1, %s408
      $region236: #{unpool.1} parent=229 // loop_footer_branch
        %407 = sbr.rel target = $region232
      $region237: #{unpool.1} parent=229 // loop_exit
        _
    $region230: #{unpool.1} parent=214 // pred_fallthru
      _
  $region215: #{unpool.1} parent=0 // pred_fallthru
    _
  // Predicated region
  $region216: #{unpool.1} parent=0 // pred_check
    %p380 = pneg %p376
  $region217: #{unpool.1} parent=0 // pred_check_branch
    %382 = sbr.rel (%p380) target = $region219
  $region218: #{unpool.1} parent=0 // pred_region
    %s383 = sshll.u32 1, 1
    %s384 = ssub.s32 %s383, 1
    loop: start=0, step=1, limit=1
    $region220: #{unpool.1} parent=218 // loop_pre_header
      _
    $region221: #{unpool.1} parent=218 // loop_header
      %s386 = sphi 0, %s390
      %p387 = scmp.ge.s32.totalorder %s386, 1
      %s391 = sphi %s372, %s372
      %s392 = sphi %s373, %s373
    $region222: #{unpool.1} parent=218 // loop_header_branch
      %389 = sbr.rel (%p387) target = $region226
    $region223: #{unpool.1} parent=218 // loop_body
      %v393 = vld [vmem:[%s391] sm:%s384]
      %394 = vst [vmem:[%s392] sm:%s384] %v393
    $region224: #{unpool.1} parent=218 // loop_footer
      %s390 = sadd.s32 1, %s386
    $region225: #{unpool.1} parent=218 // loop_footer_branch
      %385 = sbr.rel target = $region221
    $region226: #{unpool.1} parent=218 // loop_exit
      _
  $region219: #{unpool.1} parent=0 // pred_fallthru
    _
  // Predicated region
  $region238: #{unpool.1} parent=0 // pred_check
    _
  $region239: #{unpool.1} parent=0 // pred_check_branch
    %419 = sbr.rel (0) target = $region241
  $region240: #{unpool.1} parent=0 // pred_region
    %420 = vsyncadd %s374, 16
  $region241: #{unpool.1} parent=0 // pred_fallthru
    _
  %s421 = sadd.s32 %s14, 8
  %s422 = sld [smem:[#allocation4 + %s421]]
  %s423 = scalar_lea.vmem %s1, %s421
  %s424 = scalar_lea.vmem %s3, %s422
  %s425 = scalar_lea.sflag [#allocation2], 8
  %p427 = scmp.lt.u32.totalorder 1, 8
  %p428 = pneg %p427
  // Predicated region
  $region242: #{unpool.1} parent=0 // pred_check
    _
  $region243: #{unpool.1} parent=0 // pred_check_branch
    %430 = sbr.rel (%p427) target = $region245
  $region244: #{unpool.1} parent=0 // pred_region
    %s446 = sand.u32 1, 7
    %p447 = scmp.eq.s32.totalorder %s446, 0
    %p448 = pneg %p447
    // Predicated region
    $region257: #{unpool.1} parent=244 // pred_check
      _
    $region258: #{unpool.1} parent=244 // pred_check_branch
      %450 = sbr.rel (%p447) target = $region260
    $region259: #{unpool.1} parent=244 // pred_region
      %s451 = sand.u32 1, 7
      %s452 = ssub.s32 1, %s451
      %s453 = scalar_lea.vmem %s423, %s452
      %s454 = ssub.s32 1, %s451
      %s455 = scalar_lea.vmem %s424, %s454
      %s456 = sshll.u32 1, %s451
      %s457 = ssub.s32 %s456, 1
      loop: start=0, step=1, limit=1
      $region261: #{unpool.1} parent=259 // loop_pre_header
        _
      $region262: #{unpool.1} parent=259 // loop_header
        %s459 = sphi 0, %s463
        %p460 = scmp.ge.s32.totalorder %s459, 1
        %s464 = sphi %s453, %s453
        %s465 = sphi %s455, %s455
      $region263: #{unpool.1} parent=259 // loop_header_branch
        %462 = sbr.rel (%p460) target = $region267
      $region264: #{unpool.1} parent=259 // loop_body
        %v466 = vld [vmem:[%s464] sm:%s457]
        %467 = vst [vmem:[%s465] sm:%s457] %v466
      $region265: #{unpool.1} parent=259 // loop_footer
        %s463 = sadd.s32 1, %s459
      $region266: #{unpool.1} parent=259 // loop_footer_branch
        %458 = sbr.rel target = $region262
      $region267: #{unpool.1} parent=259 // loop_exit
        _
    $region260: #{unpool.1} parent=244 // pred_fallthru
      _
  $region245: #{unpool.1} parent=0 // pred_fallthru
    _
  // Predicated region
  $region246: #{unpool.1} parent=0 // pred_check
    %p431 = pneg %p427
  $region247: #{unpool.1} parent=0 // pred_check_branch
    %433 = sbr.rel (%p431) target = $region249
  $region248: #{unpool.1} parent=0 // pred_region
    %s434 = sshll.u32 1, 1
    %s435 = ssub.s32 %s434, 1
    loop: start=0, step=1, limit=1
    $region250: #{unpool.1} parent=248 // loop_pre_header
      _
    $region251: #{unpool.1} parent=248 // loop_header
      %s437 = sphi 0, %s441
      %p438 = scmp.ge.s32.totalorder %s437, 1
      %s442 = sphi %s423, %s423
      %s443 = sphi %s424, %s424
    $region252: #{unpool.1} parent=248 // loop_header_branch
      %440 = sbr.rel (%p438) target = $region256
    $region253: #{unpool.1} parent=248 // loop_body
      %v444 = vld [vmem:[%s442] sm:%s435]
      %445 = vst [vmem:[%s443] sm:%s435] %v444
    $region254: #{unpool.1} parent=248 // loop_footer
      %s441 = sadd.s32 1, %s437
    $region255: #{unpool.1} parent=248 // loop_footer_branch
      %436 = sbr.rel target = $region251
    $region256: #{unpool.1} parent=248 // loop_exit
      _
  $region249: #{unpool.1} parent=0 // pred_fallthru
    _
  // Predicated region
  $region268: #{unpool.1} parent=0 // pred_check
    _
  $region269: #{unpool.1} parent=0 // pred_check_branch
    %470 = sbr.rel (0) target = $region271
  $region270: #{unpool.1} parent=0 // pred_region
    %471 = vsyncadd %s425, 16
  $region271: #{unpool.1} parent=0 // pred_fallthru
    _
  %s472 = sadd.s32 %s14, 9
  %s473 = sld [smem:[#allocation4 + %s472]]
  %s474 = scalar_lea.vmem %s1, %s472
  %s475 = scalar_lea.vmem %s3, %s473
  %s476 = scalar_lea.sflag [#allocation2], 9
  %p478 = scmp.lt.u32.totalorder 1, 8
  %p479 = pneg %p478
  // Predicated region
  $region272: #{unpool.1} parent=0 // pred_check
    _
  $region273: #{unpool.1} parent=0 // pred_check_branch
    %481 = sbr.rel (%p478) target = $region275
  $region274: #{unpool.1} parent=0 // pred_region
    %s497 = sand.u32 1, 7
    %p498 = scmp.eq.s32.totalorder %s497, 0
    %p499 = pneg %p498
    // Predicated region
    $region287: #{unpool.1} parent=274 // pred_check
      _
    $region288: #{unpool.1} parent=274 // pred_check_branch
      %501 = sbr.rel (%p498) target = $region290
    $region289: #{unpool.1} parent=274 // pred_region
      %s502 = sand.u32 1, 7
      %s503 = ssub.s32 1, %s502
      %s504 = scalar_lea.vmem %s474, %s503
      %s505 = ssub.s32 1, %s502
      %s506 = scalar_lea.vmem %s475, %s505
      %s507 = sshll.u32 1, %s502
      %s508 = ssub.s32 %s507, 1
      loop: start=0, step=1, limit=1
      $region291: #{unpool.1} parent=289 // loop_pre_header
        _
      $region292: #{unpool.1} parent=289 // loop_header
        %s510 = sphi 0, %s514
        %p511 = scmp.ge.s32.totalorder %s510, 1
        %s515 = sphi %s504, %s504
        %s516 = sphi %s506, %s506
      $region293: #{unpool.1} parent=289 // loop_header_branch
        %513 = sbr.rel (%p511) target = $region297
      $region294: #{unpool.1} parent=289 // loop_body
        %v517 = vld [vmem:[%s515] sm:%s508]
        %518 = vst [vmem:[%s516] sm:%s508] %v517
      $region295: #{unpool.1} parent=289 // loop_footer
        %s514 = sadd.s32 1, %s510
      $region296: #{unpool.1} parent=289 // loop_footer_branch
        %509 = sbr.rel target = $region292
      $region297: #{unpool.1} parent=289 // loop_exit
        _
    $region290: #{unpool.1} parent=274 // pred_fallthru
      _
  $region275: #{unpool.1} parent=0 // pred_fallthru
    _
  // Predicated region
  $region276: #{unpool.1} parent=0 // pred_check
    %p482 = pneg %p478
  $region277: #{unpool.1} parent=0 // pred_check_branch
    %484 = sbr.rel (%p482) target = $region279
  $region278: #{unpool.1} parent=0 // pred_region
    %s485 = sshll.u32 1, 1
    %s486 = ssub.s32 %s485, 1
    loop: start=0, step=1, limit=1
    $region280: #{unpool.1} parent=278 // loop_pre_header
      _
    $region281: #{unpool.1} parent=278 // loop_header
      %s488 = sphi 0, %s492
      %p489 = scmp.ge.s32.totalorder %s488, 1
      %s493 = sphi %s474, %s474
      %s494 = sphi %s475, %s475
    $region282: #{unpool.1} parent=278 // loop_header_branch
      %491 = sbr.rel (%p489) target = $region286
    $region283: #{unpool.1} parent=278 // loop_body
      %v495 = vld [vmem:[%s493] sm:%s486]
      %496 = vst [vmem:[%s494] sm:%s486] %v495
    $region284: #{unpool.1} parent=278 // loop_footer
      %s492 = sadd.s32 1, %s488
    $region285: #{unpool.1} parent=278 // loop_footer_branch
      %487 = sbr.rel target = $region281
    $region286: #{unpool.1} parent=278 // loop_exit
      _
  $region279: #{unpool.1} parent=0 // pred_fallthru
    _
  // Predicated region
  $region298: #{unpool.1} parent=0 // pred_check
    _
  $region299: #{unpool.1} parent=0 // pred_check_branch
    %521 = sbr.rel (0) target = $region301
  $region300: #{unpool.1} parent=0 // pred_region
    %522 = vsyncadd %s476, 16
  $region301: #{unpool.1} parent=0 // pred_fallthru
    _
  %s523 = sadd.s32 %s14, 10
  %s524 = sld [smem:[#allocation4 + %s523]]
  %s525 = scalar_lea.vmem %s1, %s523
  %s526 = scalar_lea.vmem %s3, %s524
  %s527 = scalar_lea.sflag [#allocation2], 10
  %p529 = scmp.lt.u32.totalorder 1, 8
  %p530 = pneg %p529
  // Predicated region
  $region302: #{unpool.1} parent=0 // pred_check
    _
  $region303: #{unpool.1} parent=0 // pred_check_branch
    %532 = sbr.rel (%p529) target = $region305
  $region304: #{unpool.1} parent=0 // pred_region
    %s548 = sand.u32 1, 7
    %p549 = scmp.eq.s32.totalorder %s548, 0
    %p550 = pneg %p549
    // Predicated region
    $region317: #{unpool.1} parent=304 // pred_check
      _
    $region318: #{unpool.1} parent=304 // pred_check_branch
      %552 = sbr.rel (%p549) target = $region320
    $region319: #{unpool.1} parent=304 // pred_region
      %s553 = sand.u32 1, 7
      %s554 = ssub.s32 1, %s553
      %s555 = scalar_lea.vmem %s525, %s554
      %s556 = ssub.s32 1, %s553
      %s557 = scalar_lea.vmem %s526, %s556
      %s558 = sshll.u32 1, %s553
      %s559 = ssub.s32 %s558, 1
      loop: start=0, step=1, limit=1
      $region321: #{unpool.1} parent=319 // loop_pre_header
        _
      $region322: #{unpool.1} parent=319 // loop_header
        %s561 = sphi 0, %s565
        %p562 = scmp.ge.s32.totalorder %s561, 1
        %s566 = sphi %s555, %s555
        %s567 = sphi %s557, %s557
      $region323: #{unpool.1} parent=319 // loop_header_branch
        %564 = sbr.rel (%p562) target = $region327
      $region324: #{unpool.1} parent=319 // loop_body
        %v568 = vld [vmem:[%s566] sm:%s559]
        %569 = vst [vmem:[%s567] sm:%s559] %v568
      $region325: #{unpool.1} parent=319 // loop_footer
        %s565 = sadd.s32 1, %s561
      $region326: #{unpool.1} parent=319 // loop_footer_branch
        %560 = sbr.rel target = $region322
      $region327: #{unpool.1} parent=319 // loop_exit
        _
    $region320: #{unpool.1} parent=304 // pred_fallthru
      _
  $region305: #{unpool.1} parent=0 // pred_fallthru
    _
  // Predicated region
  $region306: #{unpool.1} parent=0 // pred_check
    %p533 = pneg %p529
  $region307: #{unpool.1} parent=0 // pred_check_branch
    %535 = sbr.rel (%p533) target = $region309
  $region308: #{unpool.1} parent=0 // pred_region
    %s536 = sshll.u32 1, 1
    %s537 = ssub.s32 %s536, 1
    loop: start=0, step=1, limit=1
    $region310: #{unpool.1} parent=308 // loop_pre_header
      _
    $region311: #{unpool.1} parent=308 // loop_header
      %s539 = sphi 0, %s543
      %p540 = scmp.ge.s32.totalorder %s539, 1
      %s544 = sphi %s525, %s525
      %s545 = sphi %s526, %s526
    $region312: #{unpool.1} parent=308 // loop_header_branch
      %542 = sbr.rel (%p540) target = $region316
    $region313: #{unpool.1} parent=308 // loop_body
      %v546 = vld [vmem:[%s544] sm:%s537]
      %547 = vst [vmem:[%s545] sm:%s537] %v546
    $region314: #{unpool.1} parent=308 // loop_footer
      %s543 = sadd.s32 1, %s539
    $region315: #{unpool.1} parent=308 // loop_footer_branch
      %538 = sbr.rel target = $region311
    $region316: #{unpool.1} parent=308 // loop_exit
      _
  $region309: #{unpool.1} parent=0 // pred_fallthru
    _
  // Predicated region
  $region328: #{unpool.1} parent=0 // pred_check
    _
  $region329: #{unpool.1} parent=0 // pred_check_branch
    %572 = sbr.rel (0) target = $region331
  $region330: #{unpool.1} parent=0 // pred_region
    %573 = vsyncadd %s527, 16
  $region331: #{unpool.1} parent=0 // pred_fallthru
    _
  %s574 = sadd.s32 %s14, 11
  %s575 = sld [smem:[#allocation4 + %s574]]
  %s576 = scalar_lea.vmem %s1, %s574
  %s577 = scalar_lea.vmem %s3, %s575
  %s578 = scalar_lea.sflag [#allocation2], 11
  %p580 = scmp.lt.u32.totalorder 1, 8
  %p581 = pneg %p580
  // Predicated region
  $region332: #{unpool.1} parent=0 // pred_check
    _
  $region333: #{unpool.1} parent=0 // pred_check_branch
    %583 = sbr.rel (%p580) target = $region335
  $region334: #{unpool.1} parent=0 // pred_region
    %s599 = sand.u32 1, 7
    %p600 = scmp.eq.s32.totalorder %s599, 0
    %p601 = pneg %p600
    // Predicated region
    $region347: #{unpool.1} parent=334 // pred_check
      _
    $region348: #{unpool.1} parent=334 // pred_check_branch
      %603 = sbr.rel (%p600) target = $region350
    $region349: #{unpool.1} parent=334 // pred_region
      %s604 = sand.u32 1, 7
      %s605 = ssub.s32 1, %s604
      %s606 = scalar_lea.vmem %s576, %s605
      %s607 = ssub.s32 1, %s604
      %s608 = scalar_lea.vmem %s577, %s607
      %s609 = sshll.u32 1, %s604
      %s610 = ssub.s32 %s609, 1
      loop: start=0, step=1, limit=1
      $region351: #{unpool.1} parent=349 // loop_pre_header
        _
      $region352: #{unpool.1} parent=349 // loop_header
        %s612 = sphi 0, %s616
        %p613 = scmp.ge.s32.totalorder %s612, 1
        %s617 = sphi %s606, %s606
        %s618 = sphi %s608, %s608
      $region353: #{unpool.1} parent=349 // loop_header_branch
        %615 = sbr.rel (%p613) target = $region357
      $region354: #{unpool.1} parent=349 // loop_body
        %v619 = vld [vmem:[%s617] sm:%s610]
        %620 = vst [vmem:[%s618] sm:%s610] %v619
      $region355: #{unpool.1} parent=349 // loop_footer
        %s616 = sadd.s32 1, %s612
      $region356: #{unpool.1} parent=349 // loop_footer_branch
        %611 = sbr.rel target = $region352
      $region357: #{unpool.1} parent=349 // loop_exit
        _
    $region350: #{unpool.1} parent=334 // pred_fallthru
      _
  $region335: #{unpool.1} parent=0 // pred_fallthru
    _
  // Predicated region
  $region336: #{unpool.1} parent=0 // pred_check
    %p584 = pneg %p580
  $region337: #{unpool.1} parent=0 // pred_check_branch
    %586 = sbr.rel (%p584) target = $region339
  $region338: #{unpool.1} parent=0 // pred_region
    %s587 = sshll.u32 1, 1
    %s588 = ssub.s32 %s587, 1
    loop: start=0, step=1, limit=1
    $region340: #{unpool.1} parent=338 // loop_pre_header
      _
    $region341: #{unpool.1} parent=338 // loop_header
      %s590 = sphi 0, %s594
      %p591 = scmp.ge.s32.totalorder %s590, 1
      %s595 = sphi %s576, %s576
      %s596 = sphi %s577, %s577
    $region342: #{unpool.1} parent=338 // loop_header_branch
      %593 = sbr.rel (%p591) target = $region346
    $region343: #{unpool.1} parent=338 // loop_body
      %v597 = vld [vmem:[%s595] sm:%s588]
      %598 = vst [vmem:[%s596] sm:%s588] %v597
    $region344: #{unpool.1} parent=338 // loop_footer
      %s594 = sadd.s32 1, %s590
    $region345: #{unpool.1} parent=338 // loop_footer_branch
      %589 = sbr.rel target = $region341
    $region346: #{unpool.1} parent=338 // loop_exit
      _
  $region339: #{unpool.1} parent=0 // pred_fallthru
    _
  // Predicated region
  $region358: #{unpool.1} parent=0 // pred_check
    _
  $region359: #{unpool.1} parent=0 // pred_check_branch
    %623 = sbr.rel (0) target = $region361
  $region360: #{unpool.1} parent=0 // pred_region
    %624 = vsyncadd %s578, 16
  $region361: #{unpool.1} parent=0 // pred_fallthru
    _
  %s625 = sadd.s32 %s14, 12
  %s626 = sld [smem:[#allocation4 + %s625]]
  %s627 = scalar_lea.vmem %s1, %s625
  %s628 = scalar_lea.vmem %s3, %s626
  %s629 = scalar_lea.sflag [#allocation2], 12
  %p631 = scmp.lt.u32.totalorder 1, 8
  %p632 = pneg %p631
  // Predicated region
  $region362: #{unpool.1} parent=0 // pred_check
    _
  $region363: #{unpool.1} parent=0 // pred_check_branch
    %634 = sbr.rel (%p631) target = $region365
  $region364: #{unpool.1} parent=0 // pred_region
    %s650 = sand.u32 1, 7
    %p651 = scmp.eq.s32.totalorder %s650, 0
    %p652 = pneg %p651
    // Predicated region
    $region377: #{unpool.1} parent=364 // pred_check
      _
    $region378: #{unpool.1} parent=364 // pred_check_branch
      %654 = sbr.rel (%p651) target = $region380
    $region379: #{unpool.1} parent=364 // pred_region
      %s655 = sand.u32 1, 7
      %s656 = ssub.s32 1, %s655
      %s657 = scalar_lea.vmem %s627, %s656
      %s658 = ssub.s32 1, %s655
      %s659 = scalar_lea.vmem %s628, %s658
      %s660 = sshll.u32 1, %s655
      %s661 = ssub.s32 %s660, 1
      loop: start=0, step=1, limit=1
      $region381: #{unpool.1} parent=379 // loop_pre_header
        _
      $region382: #{unpool.1} parent=379 // loop_header
        %s663 = sphi 0, %s667
        %p664 = scmp.ge.s32.totalorder %s663, 1
        %s668 = sphi %s657, %s657
        %s669 = sphi %s659, %s659
      $region383: #{unpool.1} parent=379 // loop_header_branch
        %666 = sbr.rel (%p664) target = $region387
      $region384: #{unpool.1} parent=379 // loop_body
        %v670 = vld [vmem:[%s668] sm:%s661]
        %671 = vst [vmem:[%s669] sm:%s661] %v670
      $region385: #{unpool.1} parent=379 // loop_footer
        %s667 = sadd.s32 1, %s663
      $region386: #{unpool.1} parent=379 // loop_footer_branch
        %662 = sbr.rel target = $region382
      $region387: #{unpool.1} parent=379 // loop_exit
        _
    $region380: #{unpool.1} parent=364 // pred_fallthru
      _
  $region365: #{unpool.1} parent=0 // pred_fallthru
    _
  // Predicated region
  $region366: #{unpool.1} parent=0 // pred_check
    %p635 = pneg %p631
  $region367: #{unpool.1} parent=0 // pred_check_branch
    %637 = sbr.rel (%p635) target = $region369
  $region368: #{unpool.1} parent=0 // pred_region
    %s638 = sshll.u32 1, 1
    %s639 = ssub.s32 %s638, 1
    loop: start=0, step=1, limit=1
    $region370: #{unpool.1} parent=368 // loop_pre_header
      _
    $region371: #{unpool.1} parent=368 // loop_header
      %s641 = sphi 0, %s645
      %p642 = scmp.ge.s32.totalorder %s641, 1
      %s646 = sphi %s627, %s627
      %s647 = sphi %s628, %s628
    $region372: #{unpool.1} parent=368 // loop_header_branch
      %644 = sbr.rel (%p642) target = $region376
    $region373: #{unpool.1} parent=368 // loop_body
      %v648 = vld [vmem:[%s646] sm:%s639]
      %649 = vst [vmem:[%s647] sm:%s639] %v648
    $region374: #{unpool.1} parent=368 // loop_footer
      %s645 = sadd.s32 1, %s641
    $region375: #{unpool.1} parent=368 // loop_footer_branch
      %640 = sbr.rel target = $region371
    $region376: #{unpool.1} parent=368 // loop_exit
      _
  $region369: #{unpool.1} parent=0 // pred_fallthru
    _
  // Predicated region
  $region388: #{unpool.1} parent=0 // pred_check
    _
  $region389: #{unpool.1} parent=0 // pred_check_branch
    %674 = sbr.rel (0) target = $region391
  $region390: #{unpool.1} parent=0 // pred_region
    %675 = vsyncadd %s629, 16
  $region391: #{unpool.1} parent=0 // pred_fallthru
    _
  %s676 = sadd.s32 %s14, 13
  %s677 = sld [smem:[#allocation4 + %s676]]
  %s678 = scalar_lea.vmem %s1, %s676
  %s679 = scalar_lea.vmem %s3, %s677
  %s680 = scalar_lea.sflag [#allocation2], 13
  %p682 = scmp.lt.u32.totalorder 1, 8
  %p683 = pneg %p682
  // Predicated region
  $region392: #{unpool.1} parent=0 // pred_check
    _
  $region393: #{unpool.1} parent=0 // pred_check_branch
    %685 = sbr.rel (%p682) target = $region395
  $region394: #{unpool.1} parent=0 // pred_region
    %s701 = sand.u32 1, 7
    %p702 = scmp.eq.s32.totalorder %s701, 0
    %p703 = pneg %p702
    // Predicated region
    $region407: #{unpool.1} parent=394 // pred_check
      _
    $region408: #{unpool.1} parent=394 // pred_check_branch
      %705 = sbr.rel (%p702) target = $region410
    $region409: #{unpool.1} parent=394 // pred_region
      %s706 = sand.u32 1, 7
      %s707 = ssub.s32 1, %s706
      %s708 = scalar_lea.vmem %s678, %s707
      %s709 = ssub.s32 1, %s706
      %s710 = scalar_lea.vmem %s679, %s709
      %s711 = sshll.u32 1, %s706
      %s712 = ssub.s32 %s711, 1
      loop: start=0, step=1, limit=1
      $region411: #{unpool.1} parent=409 // loop_pre_header
        _
      $region412: #{unpool.1} parent=409 // loop_header
        %s714 = sphi 0, %s718
        %p715 = scmp.ge.s32.totalorder %s714, 1
        %s719 = sphi %s708, %s708
        %s720 = sphi %s710, %s710
      $region413: #{unpool.1} parent=409 // loop_header_branch
        %717 = sbr.rel (%p715) target = $region417
      $region414: #{unpool.1} parent=409 // loop_body
        %v721 = vld [vmem:[%s719] sm:%s712]
        %722 = vst [vmem:[%s720] sm:%s712] %v721
      $region415: #{unpool.1} parent=409 // loop_footer
        %s718 = sadd.s32 1, %s714
      $region416: #{unpool.1} parent=409 // loop_footer_branch
        %713 = sbr.rel target = $region412
      $region417: #{unpool.1} parent=409 // loop_exit
        _
    $region410: #{unpool.1} parent=394 // pred_fallthru
      _
  $region395: #{unpool.1} parent=0 // pred_fallthru
    _
  // Predicated region
  $region396: #{unpool.1} parent=0 // pred_check
    %p686 = pneg %p682
  $region397: #{unpool.1} parent=0 // pred_check_branch
    %688 = sbr.rel (%p686) target = $region399
  $region398: #{unpool.1} parent=0 // pred_region
    %s689 = sshll.u32 1, 1
    %s690 = ssub.s32 %s689, 1
    loop: start=0, step=1, limit=1
    $region400: #{unpool.1} parent=398 // loop_pre_header
      _
    $region401: #{unpool.1} parent=398 // loop_header
      %s692 = sphi 0, %s696
      %p693 = scmp.ge.s32.totalorder %s692, 1
      %s697 = sphi %s678, %s678
      %s698 = sphi %s679, %s679
    $region402: #{unpool.1} parent=398 // loop_header_branch
      %695 = sbr.rel (%p693) target = $region406
    $region403: #{unpool.1} parent=398 // loop_body
      %v699 = vld [vmem:[%s697] sm:%s690]
      %700 = vst [vmem:[%s698] sm:%s690] %v699
    $region404: #{unpool.1} parent=398 // loop_footer
      %s696 = sadd.s32 1, %s692
    $region405: #{unpool.1} parent=398 // loop_footer_branch
      %691 = sbr.rel target = $region401
    $region406: #{unpool.1} parent=398 // loop_exit
      _
  $region399: #{unpool.1} parent=0 // pred_fallthru
    _
  // Predicated region
  $region418: #{unpool.1} parent=0 // pred_check
    _
  $region419: #{unpool.1} parent=0 // pred_check_branch
    %725 = sbr.rel (0) target = $region421
  $region420: #{unpool.1} parent=0 // pred_region
    %726 = vsyncadd %s680, 16
  $region421: #{unpool.1} parent=0 // pred_fallthru
    _
  %s727 = sadd.s32 %s14, 14
  %s728 = sld [smem:[#allocation4 + %s727]]
  %s729 = scalar_lea.vmem %s1, %s727
  %s730 = scalar_lea.vmem %s3, %s728
  %s731 = scalar_lea.sflag [#allocation2], 14
  %p733 = scmp.lt.u32.totalorder 1, 8
  %p734 = pneg %p733
  // Predicated region
  $region422: #{unpool.1} parent=0 // pred_check
    _
  $region423: #{unpool.1} parent=0 // pred_check_branch
    %736 = sbr.rel (%p733) target = $region425
  $region424: #{unpool.1} parent=0 // pred_region
    %s752 = sand.u32 1, 7
    %p753 = scmp.eq.s32.totalorder %s752, 0
    %p754 = pneg %p753
    // Predicated region
    $region437: #{unpool.1} parent=424 // pred_check
      _
    $region438: #{unpool.1} parent=424 // pred_check_branch
      %756 = sbr.rel (%p753) target = $region440
    $region439: #{unpool.1} parent=424 // pred_region
      %s757 = sand.u32 1, 7
      %s758 = ssub.s32 1, %s757
      %s759 = scalar_lea.vmem %s729, %s758
      %s760 = ssub.s32 1, %s757
      %s761 = scalar_lea.vmem %s730, %s760
      %s762 = sshll.u32 1, %s757
      %s763 = ssub.s32 %s762, 1
      loop: start=0, step=1, limit=1
      $region441: #{unpool.1} parent=439 // loop_pre_header
        _
      $region442: #{unpool.1} parent=439 // loop_header
        %s765 = sphi 0, %s769
        %p766 = scmp.ge.s32.totalorder %s765, 1
        %s770 = sphi %s759, %s759
        %s771 = sphi %s761, %s761
      $region443: #{unpool.1} parent=439 // loop_header_branch
        %768 = sbr.rel (%p766) target = $region447
      $region444: #{unpool.1} parent=439 // loop_body
        %v772 = vld [vmem:[%s770] sm:%s763]
        %773 = vst [vmem:[%s771] sm:%s763] %v772
      $region445: #{unpool.1} parent=439 // loop_footer
        %s769 = sadd.s32 1, %s765
      $region446: #{unpool.1} parent=439 // loop_footer_branch
        %764 = sbr.rel target = $region442
      $region447: #{unpool.1} parent=439 // loop_exit
        _
    $region440: #{unpool.1} parent=424 // pred_fallthru
      _
  $region425: #{unpool.1} parent=0 // pred_fallthru
    _
  // Predicated region
  $region426: #{unpool.1} parent=0 // pred_check
    %p737 = pneg %p733
  $region427: #{unpool.1} parent=0 // pred_check_branch
    %739 = sbr.rel (%p737) target = $region429
  $region428: #{unpool.1} parent=0 // pred_region
    %s740 = sshll.u32 1, 1
    %s741 = ssub.s32 %s740, 1
    loop: start=0, step=1, limit=1
    $region430: #{unpool.1} parent=428 // loop_pre_header
      _
    $region431: #{unpool.1} parent=428 // loop_header
      %s743 = sphi 0, %s747
      %p744 = scmp.ge.s32.totalorder %s743, 1
      %s748 = sphi %s729, %s729
      %s749 = sphi %s730, %s730
    $region432: #{unpool.1} parent=428 // loop_header_branch
      %746 = sbr.rel (%p744) target = $region436
    $region433: #{unpool.1} parent=428 // loop_body
      %v750 = vld [vmem:[%s748] sm:%s741]
      %751 = vst [vmem:[%s749] sm:%s741] %v750
    $region434: #{unpool.1} parent=428 // loop_footer
      %s747 = sadd.s32 1, %s743
    $region435: #{unpool.1} parent=428 // loop_footer_branch
      %742 = sbr.rel target = $region431
    $region436: #{unpool.1} parent=428 // loop_exit
      _
  $region429: #{unpool.1} parent=0 // pred_fallthru
    _
  // Predicated region
  $region448: #{unpool.1} parent=0 // pred_check
    _
  $region449: #{unpool.1} parent=0 // pred_check_branch
    %776 = sbr.rel (0) target = $region451
  $region450: #{unpool.1} parent=0 // pred_region
    %777 = vsyncadd %s731, 16
  $region451: #{unpool.1} parent=0 // pred_fallthru
    _
  %s778 = sadd.s32 %s14, 15
  %s779 = sld [smem:[#allocation4 + %s778]]
  %s780 = scalar_lea.vmem %s1, %s778
  %s781 = scalar_lea.vmem %s3, %s779
  %s782 = scalar_lea.sflag [#allocation2], 15
  %p784 = scmp.lt.u32.totalorder 1, 8
  %p785 = pneg %p784
  // Predicated region
  $region452: #{unpool.1} parent=0 // pred_check
    _
  $region453: #{unpool.1} parent=0 // pred_check_branch
    %787 = sbr.rel (%p784) target = $region455
  $region454: #{unpool.1} parent=0 // pred_region
    %s803 = sand.u32 1, 7
    %p804 = scmp.eq.s32.totalorder %s803, 0
    %p805 = pneg %p804
    // Predicated region
    $region467: #{unpool.1} parent=454 // pred_check
      _
    $region468: #{unpool.1} parent=454 // pred_check_branch
      %807 = sbr.rel (%p804) target = $region470
    $region469: #{unpool.1} parent=454 // pred_region
      %s808 = sand.u32 1, 7
      %s809 = ssub.s32 1, %s808
      %s810 = scalar_lea.vmem %s780, %s809
      %s811 = ssub.s32 1, %s808
      %s812 = scalar_lea.vmem %s781, %s811
      %s813 = sshll.u32 1, %s808
      %s814 = ssub.s32 %s813, 1
      loop: start=0, step=1, limit=1
      $region471: #{unpool.1} parent=469 // loop_pre_header
        _
      $region472: #{unpool.1} parent=469 // loop_header
        %s816 = sphi 0, %s820
        %p817 = scmp.ge.s32.totalorder %s816, 1
        %s821 = sphi %s810, %s810
        %s822 = sphi %s812, %s812
      $region473: #{unpool.1} parent=469 // loop_header_branch
        %819 = sbr.rel (%p817) target = $region477
      $region474: #{unpool.1} parent=469 // loop_body
        %v823 = vld [vmem:[%s821] sm:%s814]
        %824 = vst [vmem:[%s822] sm:%s814] %v823
      $region475: #{unpool.1} parent=469 // loop_footer
        %s820 = sadd.s32 1, %s816
      $region476: #{unpool.1} parent=469 // loop_footer_branch
        %815 = sbr.rel target = $region472
      $region477: #{unpool.1} parent=469 // loop_exit
        _
    $region470: #{unpool.1} parent=454 // pred_fallthru
      _
  $region455: #{unpool.1} parent=0 // pred_fallthru
    _
  // Predicated region
  $region456: #{unpool.1} parent=0 // pred_check
    %p788 = pneg %p784
  $region457: #{unpool.1} parent=0 // pred_check_branch
    %790 = sbr.rel (%p788) target = $region459
  $region458: #{unpool.1} parent=0 // pred_region
    %s791 = sshll.u32 1, 1
    %s792 = ssub.s32 %s791, 1
    loop: start=0, step=1, limit=1
    $region460: #{unpool.1} parent=458 // loop_pre_header
      _
    $region461: #{unpool.1} parent=458 // loop_header
      %s794 = sphi 0, %s798
      %p795 = scmp.ge.s32.totalorder %s794, 1
      %s799 = sphi %s780, %s780
      %s800 = sphi %s781, %s781
    $region462: #{unpool.1} parent=458 // loop_header_branch
      %797 = sbr.rel (%p795) target = $region466
    $region463: #{unpool.1} parent=458 // loop_body
      %v801 = vld [vmem:[%s799] sm:%s792]
      %802 = vst [vmem:[%s800] sm:%s792] %v801
    $region464: #{unpool.1} parent=458 // loop_footer
      %s798 = sadd.s32 1, %s794
    $region465: #{unpool.1} parent=458 // loop_footer_branch
      %793 = sbr.rel target = $region461
    $region466: #{unpool.1} parent=458 // loop_exit
      _
  $region459: #{unpool.1} parent=0 // pred_fallthru
    _
  // Predicated region
  $region478: #{unpool.1} parent=0 // pred_check
    _
  $region479: #{unpool.1} parent=0 // pred_check_branch
    %827 = sbr.rel (0) target = $region481
  $region480: #{unpool.1} parent=0 // pred_region
    %828 = vsyncadd %s782, 16
  $region481: #{unpool.1} parent=0 // pred_fallthru
    _
  %s829 = sld [smem:[#allocation4 + %s14]]
  %831 = dma.done [#allocation2], 16
  %s832 = sld [smem:[#allocation4 + %s64]]
  %834 = dma.done %s68, 16
  %s835 = sld [smem:[#allocation4 + %s115]]
  %837 = dma.done %s119, 16
  %s838 = sld [smem:[#allocation4 + %s166]]
  %840 = dma.done %s170, 16
  %s841 = sld [smem:[#allocation4 + %s217]]
  %843 = dma.done %s221, 16
  %s844 = sld [smem:[#allocation4 + %s268]]
  %846 = dma.done %s272, 16
  %s847 = sld [smem:[#allocation4 + %s319]]
  %849 = dma.done %s323, 16
  %s850 = sld [smem:[#allocation4 + %s370]]
  %852 = dma.done %s374, 16
  %s853 = sld [smem:[#allocation4 + %s421]]
  %855 = dma.done %s425, 16
  %s856 = sld [smem:[#allocation4 + %s472]]
  %858 = dma.done %s476, 16
  %s859 = sld [smem:[#allocation4 + %s523]]
  %861 = dma.done %s527, 16
  %s862 = sld [smem:[#allocation4 + %s574]]
  %864 = dma.done %s578, 16
  %s865 = sld [smem:[#allocation4 + %s625]]
  %867 = dma.done %s629, 16
  %s868 = sld [smem:[#allocation4 + %s676]]
  %870 = dma.done %s680, 16
  %s871 = sld [smem:[#allocation4 + %s727]]
  %873 = dma.done %s731, 16
  %s874 = sld [smem:[#allocation4 + %s778]]
  %876 = dma.done %s782, 16
  %877 = vsyncmov [#allocation2]
  %s878 = vpop.sfrf %877
  %p879 = scmp.eq.s32.totalorder %s878, 0
  %p880 = pneg %p879
  %882 = shalt.err (%p880)
  %s883 = scalar_lea.sflag [#allocation2], 1
  %884 = vsyncmov %s883
  %s885 = vpop.sfrf %884
  %p886 = scmp.eq.s32.totalorder %s885, 0
  %p887 = pneg %p886
  %889 = shalt.err (%p887)
  %s890 = scalar_lea.sflag [#allocation2], 2
  %891 = vsyncmov %s890
  %s892 = vpop.sfrf %891
  %p893 = scmp.eq.s32.totalorder %s892, 0
  %p894 = pneg %p893
  %896 = shalt.err (%p894)
  %s897 = scalar_lea.sflag [#allocation2], 3
  %898 = vsyncmov %s897
  %s899 = vpop.sfrf %898
  %p900 = scmp.eq.s32.totalorder %s899, 0
  %p901 = pneg %p900
  %903 = shalt.err (%p901)
  %s904 = scalar_lea.sflag [#allocation2], 4
  %905 = vsyncmov %s904
  %s906 = vpop.sfrf %905
  %p907 = scmp.eq.s32.totalorder %s906, 0
  %p908 = pneg %p907
  %910 = shalt.err (%p908)
  %s911 = scalar_lea.sflag [#allocation2], 5
  %912 = vsyncmov %s911
  %s913 = vpop.sfrf %912
  %p914 = scmp.eq.s32.totalorder %s913, 0
  %p915 = pneg %p914
  %917 = shalt.err (%p915)
  %s918 = scalar_lea.sflag [#allocation2], 6
  %919 = vsyncmov %s918
  %s920 = vpop.sfrf %919
  %p921 = scmp.eq.s32.totalorder %s920, 0
  %p922 = pneg %p921
  %924 = shalt.err (%p922)
  %s925 = scalar_lea.sflag [#allocation2], 7
  %926 = vsyncmov %s925
  %s927 = vpop.sfrf %926
  %p928 = scmp.eq.s32.totalorder %s927, 0
  %p929 = pneg %p928
  %931 = shalt.err (%p929)
  %s932 = scalar_lea.sflag [#allocation2], 8
  %933 = vsyncmov %s932
  %s934 = vpop.sfrf %933
  %p935 = scmp.eq.s32.totalorder %s934, 0
  %p936 = pneg %p935
  %938 = shalt.err (%p936)
  %s939 = scalar_lea.sflag [#allocation2], 9
  %940 = vsyncmov %s939
  %s941 = vpop.sfrf %940
  %p942 = scmp.eq.s32.totalorder %s941, 0
  %p943 = pneg %p942
  %945 = shalt.err (%p943)
  %s946 = scalar_lea.sflag [#allocation2], 10
  %947 = vsyncmov %s946
  %s948 = vpop.sfrf %947
  %p949 = scmp.eq.s32.totalorder %s948, 0
  %p950 = pneg %p949
  %952 = shalt.err (%p950)
  %s953 = scalar_lea.sflag [#allocation2], 11
  %954 = vsyncmov %s953
  %s955 = vpop.sfrf %954
  %p956 = scmp.eq.s32.totalorder %s955, 0
  %p957 = pneg %p956
  %959 = shalt.err (%p957)
  %s960 = scalar_lea.sflag [#allocation2], 12
  %961 = vsyncmov %s960
  %s962 = vpop.sfrf %961
  %p963 = scmp.eq.s32.totalorder %s962, 0
  %p964 = pneg %p963
  %966 = shalt.err (%p964)
  %s967 = scalar_lea.sflag [#allocation2], 13
  %968 = vsyncmov %s967
  %s969 = vpop.sfrf %968
  %p970 = scmp.eq.s32.totalorder %s969, 0
  %p971 = pneg %p970
  %973 = shalt.err (%p971)
  %s974 = scalar_lea.sflag [#allocation2], 14
  %975 = vsyncmov %s974
  %s976 = vpop.sfrf %975
  %p977 = scmp.eq.s32.totalorder %s976, 0
  %p978 = pneg %p977
  %980 = shalt.err (%p978)
  %s981 = scalar_lea.sflag [#allocation2], 15
  %982 = vsyncmov %s981
  %s983 = vpop.sfrf %982
  %p984 = scmp.eq.s32.totalorder %s983, 0
  %p985 = pneg %p984
  %987 = shalt.err (%p985)

</llo_original>
